<compile_context>
chip_gen: v7x
topology: tpu7x:2x2x1
jax: 0.10.0
libtpu: 0.0.40
codegen_flags: <defaults>
</compile_context>

<pallas_src>
import functools

import jax
import jax.numpy as jnp
from jax.experimental import pallas as pl
from jax.experimental.pallas import tpu as pltpu

IN_FEATURES = 512
HS = 604            # 'Kanjur' experiments would use 772; default branch is 604
OUT_FEATURES = 512


def _round_up(x, m):
    return ((x + m - 1) // m) * m


def _multi_phoc_kernel(x_ref, phoc_ref, w1_ref, b1_ref, w2_ref, b2_ref,
                       o_ref, h_ref):
    """One batch tile: o = (fc1(x) * phoc) @ w2 + b2 (feature dims lane-dense)."""
    hs = phoc_ref.shape[-1]                    # real hidden size (e.g. 604)

    # --- fc1: bf16 MXU, f32 accumulate; bias add in f32 ---------------------
    xb = x_ref[...].astype(jnp.bfloat16)       # in-kernel cast (VPU, cheap)
    h = jnp.dot(xb, w1_ref[...], preferred_element_type=jnp.float32)
    h = h + b1_ref[...]                        # (bm, hs_pad) f32
    # Columns hs..hs_pad are exactly 0 (zero-padded w1 columns, zero b1 pad).
    h_ref[...] = h

    # --- PHOC gate on the first `hs` lanes only (f32; pad lanes stay 0) -----
    h_ref[:, :hs] = h_ref[:, :hs] * phoc_ref[...]

    # --- fc2: bf16 MXU, f32 accumulate; bias add in f32 ---------------------
    out = jnp.dot(h_ref[...].astype(jnp.bfloat16), w2_ref[...],
                  preferred_element_type=jnp.float32)
    o_ref[...] = (out + b2_ref[...]).astype(o_ref.dtype)


def prepare_multi_phoc_params(w1, b1, w2, b2):
    """One-time param prep (hoisted out of the per-call forward).

    Zero-pads the hidden dim to a multiple of 128 and casts weights to bf16.
    Zero padding is an exact no-op for the math (padded fc1 columns are zero;
    padded fc2 rows are zero).  Biases stay f32.
    """
    in_f, hs = w1.shape
    assert b1.shape == (1, hs) and w2.shape[0] == hs
    hs_pad = _round_up(hs, 128)
    pad = hs_pad - hs
    w1p = jnp.pad(w1, ((0, 0), (0, pad))).astype(jnp.bfloat16)
    b1p = jnp.pad(b1, ((0, 0), (0, pad))).astype(jnp.float32)
    w2p = jnp.pad(w2, ((0, pad), (0, 0))).astype(jnp.bfloat16)
    b2p = b2.astype(jnp.float32)
    return w1p, b1p, w2p, b2p


@functools.partial(jax.jit, static_argnames=("block_batch",))
def multi_phoc_forward(x, phoc, w1p, b1p, w2p, b2p, *, block_batch=None):
    """fc2(fc1(x) * phoc); x/phoc native f32, pre-prepared padded bf16 weights."""
    B, in_f = x.shape
    hs = phoc.shape[1]
    hs_pad = w1p.shape[1]
    assert in_f == IN_FEATURES
    assert phoc.shape == (B, hs)
    assert hs_pad == _round_up(hs, 128)
    assert w1p.shape == (in_f, hs_pad) and b1p.shape == (1, hs_pad)
    assert w2p.shape == (hs_pad, OUT_FEATURES) and b2p.shape == (1, OUT_FEATURES)

    # Batch tile: multiple of 16, default capped at 512 (sweepable per gen).
    if block_batch is None:
        block_batch = min(512, _round_up(B, 16))
    bm = block_batch
    assert bm % 16 == 0, "block_batch must be a multiple of 16"

    grid = (pl.cdiv(B, bm),)   # final partial block masked by Pallas (no pad)

    # weights/biases pinned (same block every grid step -> VMEM-resident,
    # DMA'd once); x/phoc/out tiled over the batch.
    pinned = lambda shape: pl.BlockSpec(shape, lambda i: (0, 0))
    batched = lambda shape: pl.BlockSpec(shape, lambda i: (i, 0))

    flops = 2 * B * (in_f * hs_pad + hs_pad * OUT_FEATURES)
    bytes_accessed = (x.size * 4 + phoc.size * 4 + w1p.size * 2 + w2p.size * 2
                      + b1p.size * 4 + b2p.size * 4 + B * OUT_FEATURES * 4)

    return pl.pallas_call(
        _multi_phoc_kernel,
        out_shape=jax.ShapeDtypeStruct((B, OUT_FEATURES), jnp.float32),
        grid_spec=pltpu.PrefetchScalarGridSpec(
            num_scalar_prefetch=0,
            grid=grid,
            in_specs=[
                batched((bm, in_f)),             # x tile, native f32
                batched((bm, hs)),               # phoc tile, native f32 (full hs)
                pinned((in_f, hs_pad)),          # w1 bf16 (resident)
                pinned((1, hs_pad)),             # b1 f32 (resident)
                pinned((hs_pad, OUT_FEATURES)),  # w2 bf16 (resident)
                pinned((1, OUT_FEATURES)),       # b2 f32 (resident)
            ],
            out_specs=batched((bm, OUT_FEATURES)),
            scratch_shapes=[pltpu.VMEM((bm, hs_pad), jnp.float32)],  # gated h
        ),
        compiler_params=pltpu.CompilerParams(
            dimension_semantics=("parallel",),        # shard batch tiles on v7x
            vmem_limit_bytes=48 * 1024 * 1024),       # > v5e 16MiB default, < v7x 64MiB
        cost_estimate=pl.CostEstimate(
            flops=flops, transcendentals=0, bytes_accessed=bytes_accessed),
    )(x, phoc, w1p, b1p, w2p, b2p)


def _reference_f32(x, phoc, w1, b1, w2, b2):
    # Pure-f32 reference of fc2(fc1(x) * phoc)
    h = x @ w1 + b1
    return (h * phoc) @ w2 + b2


def _reference_bf16_path(x, phoc, w1, b1, w2, b2):
    # Mirrors the kernel's rounding: bf16 x/weights, f32 accumulation,
    # f32 bias + f32 phoc gate, bf16 feed into fc2.
    bf = lambda a: a.astype(jnp.bfloat16).astype(jnp.float32)
    h = bf(x) @ bf(w1) + b1
    h = h * phoc                                  # gate stays f32
    h = h.astype(jnp.bfloat16).astype(jnp.float32)
    return h @ bf(w2) + b2


if __name__ == "__main__":
    key = jax.random.PRNGKey(0)
    kx, kp, kw1, kb1, kw2, kb2 = jax.random.split(key, 6)

    B = 40  # small batch; with block_batch=32 -> 2 tiles incl. a partial edge block

    # Deterministic parameter init (PyTorch-Linear-style uniform bounds).
    bound1 = 1.0 / jnp.sqrt(IN_FEATURES)
    bound2 = 1.0 / jnp.sqrt(HS)
    w1 = jax.random.uniform(kw1, (IN_FEATURES, HS), jnp.float32, -bound1, bound1)
    b1 = jax.random.uniform(kb1, (1, HS), jnp.float32, -bound1, bound1)
    w2 = jax.random.uniform(kw2, (HS, OUT_FEATURES), jnp.float32, -bound2, bound2)
    b2 = jax.random.uniform(kb2, (1, OUT_FEATURES), jnp.float32, -bound2, bound2)

    x = jax.random.normal(kx, (B, IN_FEATURES), jnp.float32)
    phoc = jax.random.uniform(kp, (B, HS), jnp.float32)  # PHOC-style gate in [0,1)

    # One-time param prep (hoisted out of the forward).
    params = prepare_multi_phoc_params(w1, b1, w2, b2)

    # Multi-tile run with a partial final batch block (B=40, bm=32).
    out = multi_phoc_forward(x, phoc, *params, block_batch=32)
    out = jax.block_until_ready(out)
    assert out.shape == (B, OUT_FEATURES)

    # Tight check against a reference with the same bf16 rounding as the kernel.
    ref_bf16 = _reference_bf16_path(x, phoc, w1, b1, w2, b2)
    assert jnp.allclose(out, ref_bf16, atol=2e-3, rtol=2e-3)

    # Loose sanity check against the pure-f32 forward (bf16 weight quantization).
    ref_f32 = _reference_f32(x, phoc, w1, b1, w2, b2)
    assert jnp.allclose(out, ref_f32, atol=1e-1, rtol=1e-1)

    # Default-tiling run (single tile, grid=(1,)) must agree too.
    out_default = jax.block_until_ready(multi_phoc_forward(x, phoc, *params))
    assert jnp.allclose(out_default, ref_bf16, atol=2e-3, rtol=2e-3)

    print("KERNEL_OK")
</pallas_src>

<mosaic_0001>
module attributes {stable_mosaic.version = 11 : i64} {
  func.func @_multi_phoc_kernel(%arg0: i32, %arg1: memref<32x512xf32, #tpu.memory_space<vmem>>, %arg2: memref<32x604xf32, #tpu.memory_space<vmem>>, %arg3: memref<512x640xbf16, #tpu.memory_space<vmem>>, %arg4: memref<1x640xf32, #tpu.memory_space<vmem>>, %arg5: memref<640x512xbf16, #tpu.memory_space<vmem>>, %arg6: memref<1x512xf32, #tpu.memory_space<vmem>>, %arg7: memref<32x512xf32, #tpu.memory_space<vmem>>, %arg8: memref<32x640xf32, #tpu.memory_space<vmem>>) attributes {dimension_semantics = [#tpu.dimension_semantics<parallel>], iteration_bounds = array<i64: 2>, scalar_prefetch = 0 : i64, scratch_operands = 1 : i64, tpu.core_type = #tpu.core_type<tc>, window_params = [{transform_indices = @transform_0, window_bounds = array<i64: 32, 512>}, {transform_indices = @transform_1, window_bounds = array<i64: 32, 604>}, {pipeline_mode = #tpu.pipeline_mode<synchronous>, transform_indices = @transform_2, window_bounds = array<i64: 512, 640>}, {pipeline_mode = #tpu.pipeline_mode<synchronous>, transform_indices = @transform_3, window_bounds = array<i64: 1, 640>}, {pipeline_mode = #tpu.pipeline_mode<synchronous>, transform_indices = @transform_4, window_bounds = array<i64: 640, 512>}, {pipeline_mode = #tpu.pipeline_mode<synchronous>, transform_indices = @transform_5, window_bounds = array<i64: 1, 512>}, {transform_indices = @transform_6, window_bounds = array<i64: 32, 512>}]} {
    %c0 = arith.constant 0 : index
    %c0_0 = arith.constant 0 : index
    %0 = vector.load %arg1[%c0, %c0_0] : memref<32x512xf32, #tpu.memory_space<vmem>>, vector<32x512xf32>
    %1 = arith.truncf %0 : vector<32x512xf32> to vector<32x512xbf16>
    %c0_1 = arith.constant 0 : index
    %c0_2 = arith.constant 0 : index
    %2 = vector.load %arg3[%c0_1, %c0_2] : memref<512x640xbf16, #tpu.memory_space<vmem>>, vector<512x640xbf16>
    %cst = arith.constant dense<0.000000e+00> : vector<32x640xf32>
    %3 = tpu.matmul %1, %2, %cst {dimension_numbers = #tpu.dot_dimension_numbers<[1], [0], [0], [1], [0, 0, 1, 1], [], []>} : vector<32x512xbf16>, vector<512x640xbf16>, vector<32x640xf32> -> vector<32x640xf32>
    %c0_3 = arith.constant 0 : index
    %c0_4 = arith.constant 0 : index
    %4 = vector.load %arg4[%c0_3, %c0_4] : memref<1x640xf32, #tpu.memory_space<vmem>>, vector<1x640xf32>
    %5 = vector.broadcast %4 : vector<1x640xf32> to vector<32x640xf32>
    %6 = arith.addf %3, %5 : vector<32x640xf32>
    %c0_5 = arith.constant 0 : index
    %c0_6 = arith.constant 0 : index
    %7 = vector.load %arg8[%c0_5, %c0_6] : memref<32x640xf32, #tpu.memory_space<vmem>>, vector<32x640xf32>
    tpu.vector_store %arg8[%c0_5, %c0_6], %6 {strides = array<i32>} : memref<32x640xf32, #tpu.memory_space<vmem>>, vector<32x640xf32>,
    %c0_7 = arith.constant 0 : index
    %c0_8 = arith.constant 0 : index
    %8 = vector.load %arg8[%c0_7, %c0_8] : memref<32x640xf32, #tpu.memory_space<vmem>>, vector<32x604xf32>
    %c0_9 = arith.constant 0 : index
    %c0_10 = arith.constant 0 : index
    %9 = vector.load %arg2[%c0_9, %c0_10] : memref<32x604xf32, #tpu.memory_space<vmem>>, vector<32x604xf32>
    %10 = arith.mulf %8, %9 : vector<32x604xf32>
    %c0_11 = arith.constant 0 : index
    %c0_12 = arith.constant 0 : index
    %11 = vector.load %arg8[%c0_11, %c0_12] : memref<32x640xf32, #tpu.memory_space<vmem>>, vector<32x604xf32>
    tpu.vector_store %arg8[%c0_11, %c0_12], %10 {strides = array<i32>} : memref<32x640xf32, #tpu.memory_space<vmem>>, vector<32x604xf32>,
    %c0_13 = arith.constant 0 : index
    %c0_14 = arith.constant 0 : index
    %12 = vector.load %arg8[%c0_13, %c0_14] : memref<32x640xf32, #tpu.memory_space<vmem>>, vector<32x640xf32>
    %13 = arith.truncf %12 : vector<32x640xf32> to vector<32x640xbf16>
    %c0_15 = arith.constant 0 : index
    %c0_16 = arith.constant 0 : index
    %14 = vector.load %arg5[%c0_15, %c0_16] : memref<640x512xbf16, #tpu.memory_space<vmem>>, vector<640x512xbf16>
    %cst_17 = arith.constant dense<0.000000e+00> : vector<32x512xf32>
    %15 = tpu.matmul %13, %14, %cst_17 {dimension_numbers = #tpu.dot_dimension_numbers<[1], [0], [0], [1], [0, 0, 1, 1], [], []>} : vector<32x640xbf16>, vector<640x512xbf16>, vector<32x512xf32> -> vector<32x512xf32>
    %c0_18 = arith.constant 0 : index
    %c0_19 = arith.constant 0 : index
    %16 = vector.load %arg6[%c0_18, %c0_19] : memref<1x512xf32, #tpu.memory_space<vmem>>, vector<1x512xf32>
    %17 = vector.broadcast %16 : vector<1x512xf32> to vector<32x512xf32>
    %18 = arith.addf %15, %17 : vector<32x512xf32>
    %c0_20 = arith.constant 0 : index
    %c0_21 = arith.constant 0 : index
    %19 = vector.load %arg7[%c0_20, %c0_21] : memref<32x512xf32, #tpu.memory_space<vmem>>, vector<32x512xf32>
    tpu.vector_store %arg7[%c0_20, %c0_21], %18 {strides = array<i32>} : memref<32x512xf32, #tpu.memory_space<vmem>>, vector<32x512xf32>,
    return
  }
  func.func @transform_0(%arg0: i32) -> (i32, i32) {
    %c0_i32 = arith.constant 0 : i32
    %c0_i32_0 = arith.constant 0 : i32
    return %arg0, %c0_i32 : i32, i32
  }
  func.func @transform_1(%arg0: i32) -> (i32, i32) {
    %c0_i32 = arith.constant 0 : i32
    %c0_i32_0 = arith.constant 0 : i32
    return %arg0, %c0_i32 : i32, i32
  }
  func.func @transform_2(%arg0: i32) -> (i32, i32) {
    %c0_i32 = arith.constant 0 : i32
    %c0_i32_0 = arith.constant 0 : i32
    %c0_i32_1 = arith.constant 0 : i32
    return %c0_i32, %c0_i32_0 : i32, i32
  }
  func.func @transform_3(%arg0: i32) -> (i32, i32) {
    %c0_i32 = arith.constant 0 : i32
    %c0_i32_0 = arith.constant 0 : i32
    %c0_i32_1 = arith.constant 0 : i32
    return %c0_i32, %c0_i32_0 : i32, i32
  }
  func.func @transform_4(%arg0: i32) -> (i32, i32) {
    %c0_i32 = arith.constant 0 : i32
    %c0_i32_0 = arith.constant 0 : i32
    %c0_i32_1 = arith.constant 0 : i32
    return %c0_i32, %c0_i32_0 : i32, i32
  }
  func.func @transform_5(%arg0: i32) -> (i32, i32) {
    %c0_i32 = arith.constant 0 : i32
    %c0_i32_0 = arith.constant 0 : i32
    %c0_i32_1 = arith.constant 0 : i32
    return %c0_i32, %c0_i32_0 : i32, i32
  }
  func.func @transform_6(%arg0: i32) -> (i32, i32) {
    %c0_i32 = arith.constant 0 : i32
    %c0_i32_0 = arith.constant 0 : i32
    return %arg0, %c0_i32 : i32, i32
  }
}

</mosaic_0001>

<llo_original>
// kernel: multi_phoc_forward.1
$region0: #{multi_phoc_forward.1}
  #allocation0 [shape = 'u32[]', space=smem, size = 0x4, offset = 0x4, fixed_abs, tag = 'smem constant byte address 0x4 - core index']
  #allocation1 [shape = 'u32[144,128]{1,0:T(1,128)}', space=vmem, size = 0x12000, scoped, tag = 'internal scratch']
  #allocation2 [shape = 'f32[32,640]{1,0:T(8,128)}', space=vmem, size = 0x14000, scoped, tag = 'scratch operand']
  %s0 = inlined_call_operand.hbm [shape: f32[40,512], index: 0, kind: input, shape index: {}]
  %s1 = inlined_call_operand.hbm [shape: f32[40,604], index: 1, kind: input, shape index: {}]
  %s2 = inlined_call_operand.hbm [shape: bf16[512,640], index: 2, kind: input, shape index: {}]
  %s3 = inlined_call_operand.vmem [shape: f32[1,640], index: 3, kind: input, shape index: {}]
  %s4 = inlined_call_operand.hbm [shape: bf16[640,512], index: 4, kind: input, shape index: {}]
  %s5 = inlined_call_operand.vmem [shape: f32[1,512], index: 5, kind: input, shape index: {}]
  %s6 = inlined_call_operand.hbm [shape: f32[40,512], index: 6, kind: output, shape index: {}]
  %s7 = sld [smem:[#allocation0]]
  $region73: #{multi_phoc_forward.1} parent=0
    _
  %s9 = ssub.s32 1, %s7
  %s10 = scalar_select 0, %s9, %s7
  $region1: #{multi_phoc_forward.1} parent=0
    #allocation3 [shape = 'u8[131072]{0}', space=vmem, size = 0x20000, scoped, tag = 'input window, operand 0']
    #allocation4 [shape = 's32[2]{0}', space=sflag, size = 0x8, scoped, tag = 'scoped memory for multi_phoc_forward.1']
    #allocation5 [shape = 's32[2]{0}', space=sflag, size = 0x8, scoped, tag = 'scoped memory for multi_phoc_forward.1']
    #allocation6 [shape = 'u8[163840]{0}', space=vmem, size = 0x28000, scoped, tag = 'input window, operand 1']
    #allocation7 [shape = 's32[2]{0}', space=sflag, size = 0x8, scoped, tag = 'scoped memory for multi_phoc_forward.1']
    #allocation8 [shape = 'u8[655360]{0}', space=vmem, size = 0xa0000, scoped, tag = 'input window, operand 2, single buffered']
    #allocation9 [shape = 'u8[655360]{0}', space=vmem, size = 0xa0000, scoped, tag = 'input window, operand 4, single buffered']
    #allocation10 [shape = 's32[1]{0}', space=sflag, size = 0x4, scoped, tag = 'scoped memory for multi_phoc_forward.1']
    #allocation11 [shape = 'u8[131072]{0}', space=vmem, size = 0x20000, scoped, tag = 'output window, operand 0']
    %11 = vsyncpa [#allocation4], 0
    %s12 = scalar_lea.sflag [#allocation4], 1
    %13 = vsyncpa %s12, 0
    %14 = vsyncpa [#allocation7], 0
    %s15 = scalar_lea.sflag [#allocation7], 1
    %16 = vsyncpa %s15, 0
    %17 = vsyncpa [#allocation10], 0
    %18 = vsyncpa [#allocation5], 0
    %s19 = scalar_lea.sflag [#allocation5], 1
    %20 = vsyncpa %s19, 0
    loop: start=0, step=1, limit=4
    $region2: #{multi_phoc_forward.1} parent=1 // loop_pre_header
      _
    $region3: #{multi_phoc_forward.1} parent=1 // loop_header
      %s22 = sphi 0, %s26
      %p23 = scmp.ge.s32.totalorder %s22, 4
      %s32 = sphi 0, %s34
      %s35 = sphi 0, %s32
      %s36 = sphi 0, %s35
      %s52 = sphi 0, %s36
      %s58 = sphi 0, %s60
      %s61 = sphi 0, %s58
      %s62 = sphi 0, %s61
      %s78 = sphi 0, %s62
      %s82 = sphi 0, %s82
      %s84 = sphi 0, %s82
      %s85 = sphi 0, %s84
      %s99 = sphi 0, %s85
      %s103 = sphi 0, %s103
      %s105 = sphi 0, %s103
      %s106 = sphi 0, %s105
      %s120 = sphi 0, %s106
      %s124 = sphi 0, %s124
      %s126 = sphi 0, %s124
      %s127 = sphi 0, %s126
      %s141 = sphi 0, %s127
      %s145 = sphi 0, %s145
      %s147 = sphi 0, %s145
      %s148 = sphi 0, %s147
      %s162 = sphi 0, %s148
      %s168 = sphi 0, %s170
      %s171 = sphi 0, %s168
      %s172 = sphi 0, %s171
      %s188 = sphi 0, %s172
    $region4: #{multi_phoc_forward.1} parent=1 // loop_header_branch
      %25 = sbr.rel (%p23) target = $region8
    $region5: #{multi_phoc_forward.1} parent=1 // loop_body
      %s27 = ssub.s32 %s22, 1
      %s28 = ssub.s32 %s22, 2
      %s29 = sadd.s32 %s22, 1
      %s30 = ssub.s32 %s22, %s29
      %p31 = scmp.eq.s32.totalorder %s30, 0
      %s33 = sadd.s32 %s32, 1
      %s34 = scalar_select %p31, %s32, %s33
      %p37 = pneg %p31
      %p38 = scmp.eq.s32.totalorder %s22, 1
      %p39 = por %p37, %p38
      %p40 = scmp.ne.s32.totalorder %s32, %s35
      %p41 = scmp.eq.s32.totalorder %s22, 0
      %p42 = por %p40, %p41
      %p43 = scmp.ne.s32.totalorder %s32, %s35
      %p44 = scmp.eq.s32.totalorder %s27, 1
      %p45 = por %p43, %p44
      %p46 = scmp.ne.s32.totalorder %s35, %s36
      %p47 = scmp.eq.s32.totalorder %s27, 0
      %p48 = por %p46, %p47
      %p49 = scmp.ne.s32.totalorder %s35, %s36
      %p50 = scmp.eq.s32.totalorder %s28, 1
      %p51 = por %p49, %p50
      %p53 = scmp.ne.s32.totalorder %s36, %s52
      %p54 = scmp.eq.s32.totalorder %s28, 0
      %p55 = por %p53, %p54
      %s56 = ssub.s32 %s22, %s29
      %p57 = scmp.eq.s32.totalorder %s56, 0
      %s59 = sadd.s32 %s58, 1
      %s60 = scalar_select %p57, %s58, %s59
      %p63 = pneg %p57
      %p64 = scmp.eq.s32.totalorder %s22, 1
      %p65 = por %p63, %p64
      %p66 = scmp.ne.s32.totalorder %s58, %s61
      %p67 = scmp.eq.s32.totalorder %s22, 0
      %p68 = por %p66, %p67
      %p69 = scmp.ne.s32.totalorder %s58, %s61
      %p70 = scmp.eq.s32.totalorder %s27, 1
      %p71 = por %p69, %p70
      %p72 = scmp.ne.s32.totalorder %s61, %s62
      %p73 = scmp.eq.s32.totalorder %s27, 0
      %p74 = por %p72, %p73
      %p75 = scmp.ne.s32.totalorder %s61, %s62
      %p76 = scmp.eq.s32.totalorder %s28, 1
      %p77 = por %p75, %p76
      %p79 = scmp.ne.s32.totalorder %s62, %s78
      %p80 = scmp.eq.s32.totalorder %s28, 0
      %p81 = por %p79, %p80
      %s83 = sadd.s32 %s82, 1
      %p86 = scmp.eq.s32.totalorder %s22, 1
      %p87 = scmp.ne.s32.totalorder %s82, %s84
      %p88 = scmp.eq.s32.totalorder %s22, 0
      %p89 = por %p87, %p88
      %p90 = scmp.ne.s32.totalorder %s82, %s84
      %p91 = scmp.eq.s32.totalorder %s27, 1
      %p92 = por %p90, %p91
      %p93 = scmp.ne.s32.totalorder %s84, %s85
      %p94 = scmp.eq.s32.totalorder %s27, 0
      %p95 = por %p93, %p94
      %p96 = scmp.ne.s32.totalorder %s84, %s85
      %p97 = scmp.eq.s32.totalorder %s28, 1
      %p98 = por %p96, %p97
      %p100 = scmp.ne.s32.totalorder %s85, %s99
      %p101 = scmp.eq.s32.totalorder %s28, 0
      %p102 = por %p100, %p101
      %s104 = sadd.s32 %s103, 1
      %p107 = scmp.eq.s32.totalorder %s22, 1
      %p108 = scmp.ne.s32.totalorder %s103, %s105
      %p109 = scmp.eq.s32.totalorder %s22, 0
      %p110 = por %p108, %p109
      %p111 = scmp.ne.s32.totalorder %s103, %s105
      %p112 = scmp.eq.s32.totalorder %s27, 1
      %p113 = por %p111, %p112
      %p114 = scmp.ne.s32.totalorder %s105, %s106
      %p115 = scmp.eq.s32.totalorder %s27, 0
      %p116 = por %p114, %p115
      %p117 = scmp.ne.s32.totalorder %s105, %s106
      %p118 = scmp.eq.s32.totalorder %s28, 1
      %p119 = por %p117, %p118
      %p121 = scmp.ne.s32.totalorder %s106, %s120
      %p122 = scmp.eq.s32.totalorder %s28, 0
      %p123 = por %p121, %p122
      %s125 = sadd.s32 %s124, 1
      %p128 = scmp.eq.s32.totalorder %s22, 1
      %p129 = scmp.ne.s32.totalorder %s124, %s126
      %p130 = scmp.eq.s32.totalorder %s22, 0
      %p131 = por %p129, %p130
      %p132 = scmp.ne.s32.totalorder %s124, %s126
      %p133 = scmp.eq.s32.totalorder %s27, 1
      %p134 = por %p132, %p133
      %p135 = scmp.ne.s32.totalorder %s126, %s127
      %p136 = scmp.eq.s32.totalorder %s27, 0
      %p137 = por %p135, %p136
      %p138 = scmp.ne.s32.totalorder %s126, %s127
      %p139 = scmp.eq.s32.totalorder %s28, 1
      %p140 = por %p138, %p139
      %p142 = scmp.ne.s32.totalorder %s127, %s141
      %p143 = scmp.eq.s32.totalorder %s28, 0
      %p144 = por %p142, %p143
      %s146 = sadd.s32 %s145, 1
      %p149 = scmp.eq.s32.totalorder %s22, 1
      %p150 = scmp.ne.s32.totalorder %s145, %s147
      %p151 = scmp.eq.s32.totalorder %s22, 0
      %p152 = por %p150, %p151
      %p153 = scmp.ne.s32.totalorder %s145, %s147
      %p154 = scmp.eq.s32.totalorder %s27, 1
      %p155 = por %p153, %p154
      %p156 = scmp.ne.s32.totalorder %s147, %s148
      %p157 = scmp.eq.s32.totalorder %s27, 0
      %p158 = por %p156, %p157
      %p159 = scmp.ne.s32.totalorder %s147, %s148
      %p160 = scmp.eq.s32.totalorder %s28, 1
      %p161 = por %p159, %p160
      %p163 = scmp.ne.s32.totalorder %s148, %s162
      %p164 = scmp.eq.s32.totalorder %s28, 0
      %p165 = por %p163, %p164
      %s166 = ssub.s32 %s22, %s29
      %p167 = scmp.eq.s32.totalorder %s166, 0
      %s169 = sadd.s32 %s168, 1
      %s170 = scalar_select %p167, %s168, %s169
      %p173 = pneg %p167
      %p174 = scmp.eq.s32.totalorder %s22, 1
      %p175 = por %p173, %p174
      %p176 = scmp.ne.s32.totalorder %s168, %s171
      %p177 = scmp.eq.s32.totalorder %s22, 0
      %p178 = por %p176, %p177
      %p179 = scmp.ne.s32.totalorder %s168, %s171
      %p180 = scmp.eq.s32.totalorder %s27, 1
      %p181 = por %p179, %p180
      %p182 = scmp.ne.s32.totalorder %s171, %s172
      %p183 = scmp.eq.s32.totalorder %s27, 0
      %p184 = por %p182, %p183
      %p185 = scmp.ne.s32.totalorder %s171, %s172
      %p186 = scmp.eq.s32.totalorder %s28, 1
      %p187 = por %p185, %p186
      %p189 = scmp.ne.s32.totalorder %s172, %s188
      %p190 = scmp.eq.s32.totalorder %s28, 0
      %p191 = por %p189, %p190
      %p192 = scmp.le.s32.totalorder 1, %s22
      %p193 = scmp.lt.s32.totalorder %s22, 3
      %p194 = pnand %p192, %p193
      %p195 = pneg %p194
      // Predicated region
      $region9: #{multi_phoc_forward.1} parent=5 // pred_check
        _
      $region10: #{multi_phoc_forward.1} parent=5 // pred_check_branch
        %197 = sbr.rel (%p194) target = $region12
      $region11: #{multi_phoc_forward.1} parent=5 // pred_region
        %s198 = ssub.s32 %s22, 1
        // Predicated region
        $region13: #{multi_phoc_forward.1} parent=11 // pred_check
          %p199 = pneg %p95
        $region14: #{multi_phoc_forward.1} parent=11 // pred_check_branch
          %201 = sbr.rel (%p199) target = $region16
        $region15: #{multi_phoc_forward.1} parent=11 // pred_region
          %s203 = ssub.s32 20480, 20480
          %204 = vsyncadd [#allocation7], %s203
          %s205 = sshll.u32 [#allocation8], 4
          %s206 = int_to_ptr.vmem [resolvable:$true] %s205
          %211 = dma.hbm_to_vmem [thread:$0]  %s2, 20480, %s206, [#allocation7], 320, 320, 20
        $region16: #{multi_phoc_forward.1} parent=11 // pred_fallthru
          _
        // Predicated region
        $region17: #{multi_phoc_forward.1} parent=11 // pred_check
          %p212 = pneg %p116
        $region18: #{multi_phoc_forward.1} parent=11 // pred_check_branch
          %214 = sbr.rel (%p212) target = $region20
        $region19: #{multi_phoc_forward.1} parent=11 // pred_region
          _
        $region20: #{multi_phoc_forward.1} parent=11 // pred_fallthru
          _
        // Predicated region
        $region21: #{multi_phoc_forward.1} parent=11 // pred_check
          %p215 = pneg %p137
        $region22: #{multi_phoc_forward.1} parent=11 // pred_check_branch
          %217 = sbr.rel (%p215) target = $region24
        $region23: #{multi_phoc_forward.1} parent=11 // pred_region
          %s219 = ssub.s32 20480, 20480
          %220 = vsyncadd [#allocation10], %s219
          %s221 = sshll.u32 [#allocation9], 4
          %s222 = int_to_ptr.vmem [resolvable:$true] %s221
          %227 = dma.hbm_to_vmem [thread:$0]  %s4, 20480, %s222, [#allocation10], 256, 256, 16
        $region24: #{multi_phoc_forward.1} parent=11 // pred_fallthru
          _
        // Predicated region
        $region25: #{multi_phoc_forward.1} parent=11 // pred_check
          %p228 = pneg %p158
        $region26: #{multi_phoc_forward.1} parent=11 // pred_check_branch
          %230 = sbr.rel (%p228) target = $region28
        $region27: #{multi_phoc_forward.1} parent=11 // pred_region
          _
        $region28: #{multi_phoc_forward.1} parent=11 // pred_fallthru
          _
      $region12: #{multi_phoc_forward.1} parent=5 // pred_fallthru
        _
      %p231 = scmp.lt.s32.totalorder %s22, 2
      // Predicated region
      $region29: #{multi_phoc_forward.1} parent=5 // pred_check
        %p232 = pneg %p231
      $region30: #{multi_phoc_forward.1} parent=5 // pred_check_branch
        %234 = sbr.rel (%p232) target = $region32
      $region31: #{multi_phoc_forward.1} parent=5 // pred_region
        // Predicated region
        $region33: #{multi_phoc_forward.1} parent=31 // pred_check
          %p235 = pneg %p42
        $region34: #{multi_phoc_forward.1} parent=31 // pred_check_branch
          %237 = sbr.rel (%p235) target = $region36
        $region35: #{multi_phoc_forward.1} parent=31 // pred_region
          %s238 = sand.u32 %s32, 1
          %s239 = scalar_lea.sflag [#allocation4], %s238
          %s240 = sand.u32 %s32, 1
          %s241 = smul.addr %s240, 128
          %s242 = scalar_lea.vmem [#allocation3], %s241
          %s243 = smul.u32 4, %s22
          %s244 = ssub.s32 5, %s243
          %p245 = scmp.lt.s32.totalorder %s244, 4
          %s246 = scalar_select %p245, %s244, 4
          %s247 = smul.u32 128, %s246
          %s248 = smul.u32 %s247, 4
          %s250 = ssub.s32 2048, %s248
          %251 = vsyncadd %s239, %s250
          %p252 = scmp.ne.s32.totalorder 0, %s248
          %s253 = smul.addr %s243, 4
          %s254 = smul.addr %s253, 128
          %s255 = scalar_lea.hbm %s0, %s254
          %s256 = smul.u32 32, %s246
          %s257 = sshll.u32 %s242, 4
          %s258 = int_to_ptr.vmem [resolvable:$true] %s257
          %s259 = sshll.u32 %s256, 4
          %263 = dma.hbm_to_vmem [thread:$0]  (%p252), %s255, %s259, %s258, %s239, 512, 512, 32
        $region36: #{multi_phoc_forward.1} parent=31 // pred_fallthru
          _
        // Predicated region
        $region37: #{multi_phoc_forward.1} parent=31 // pred_check
          %p264 = pneg %p68
        $region38: #{multi_phoc_forward.1} parent=31 // pred_check_branch
          %266 = sbr.rel (%p264) target = $region40
        $region39: #{multi_phoc_forward.1} parent=31 // pred_region
          %s267 = sand.u32 %s22, 1
          %s268 = scalar_lea.sflag [#allocation7], %s267
          %s269 = sand.u32 %s58, 1
          %s270 = smul.addr %s269, 160
          %s271 = scalar_lea.vmem [#allocation6], %s270
          %s272 = smul.u32 4, %s22
          %s273 = ssub.s32 5, %s272
          %p274 = scmp.lt.s32.totalorder %s273, 4
          %s275 = scalar_select %p274, %s273, 4
          %s276 = smul.u32 128, %s275
          %s277 = smul.u32 %s276, 5
          %s279 = ssub.s32 2560, %s277
          %280 = vsyncadd %s268, %s279
          %p281 = scmp.ne.s32.totalorder 0, %s277
          %s282 = smul.addr %s272, 5
          %s283 = smul.addr %s282, 128
          %s284 = scalar_lea.hbm %s1, %s283
          %s285 = smul.u32 40, %s275
          %s286 = sshll.u32 %s271, 4
          %s287 = int_to_ptr.vmem [resolvable:$true] %s286
          %s288 = sshll.u32 %s285, 4
          %292 = dma.hbm_to_vmem [thread:$0]  (%p281), %s284, %s288, %s287, %s268, 640, 640, 40
        $region40: #{multi_phoc_forward.1} parent=31 // pred_fallthru
          _
      $region32: #{multi_phoc_forward.1} parent=5 // pred_fallthru
        _
      %p293 = scmp.le.s32.totalorder 1, %s22
      %p294 = scmp.lt.s32.totalorder %s22, 3
      %p295 = pnand %p293, %p294
      %p296 = pneg %p295
      // Predicated region
      $region41: #{multi_phoc_forward.1} parent=5 // pred_check
        _
      $region42: #{multi_phoc_forward.1} parent=5 // pred_check_branch
        %298 = sbr.rel (%p295) target = $region44
      $region43: #{multi_phoc_forward.1} parent=5 // pred_region
        %s299 = ssub.s32 %s22, 1
        %s300 = sand.u32 %s35, 1
        %s301 = scalar_lea.sflag [#allocation4], %s300
        %s302 = sand.u32 %s35, 1
        %s303 = smul.addr %s302, 128
        %s304 = scalar_lea.vmem [#allocation3], %s303
        // Predicated region
        $region45: #{multi_phoc_forward.1} parent=43 // pred_check
          %p305 = pneg %p48
        $region46: #{multi_phoc_forward.1} parent=43 // pred_check_branch
          %307 = sbr.rel (%p305) target = $region48
        $region47: #{multi_phoc_forward.1} parent=43 // pred_region
          %308 = dma.done %s301, 2048
        $region48: #{multi_phoc_forward.1} parent=43 // pred_fallthru
          _
        %s309 = sand.u32 %s27, 1
        %s310 = scalar_lea.sflag [#allocation7], %s309
        %s311 = sand.u32 %s61, 1
        %s312 = smul.addr %s311, 160
        %s313 = scalar_lea.vmem [#allocation6], %s312
        // Predicated region
        $region49: #{multi_phoc_forward.1} parent=43 // pred_check
          %p314 = pneg %p74
        $region50: #{multi_phoc_forward.1} parent=43 // pred_check_branch
          %316 = sbr.rel (%p314) target = $region52
        $region51: #{multi_phoc_forward.1} parent=43 // pred_region
          %317 = dma.done %s310, 2560
        $region52: #{multi_phoc_forward.1} parent=43 // pred_fallthru
          _
        // Predicated region
        $region53: #{multi_phoc_forward.1} parent=43 // pred_check
          %p318 = pneg %p95
        $region54: #{multi_phoc_forward.1} parent=43 // pred_check_branch
          %320 = sbr.rel (%p318) target = $region56
        $region55: #{multi_phoc_forward.1} parent=43 // pred_region
          %321 = dma.done [#allocation7], 20480
        $region56: #{multi_phoc_forward.1} parent=43 // pred_fallthru
          _
        // Predicated region
        $region57: #{multi_phoc_forward.1} parent=43 // pred_check
          %p322 = pneg %p137
        $region58: #{multi_phoc_forward.1} parent=43 // pred_check_branch
          %324 = sbr.rel (%p322) target = $region60
        $region59: #{multi_phoc_forward.1} parent=43 // pred_region
          %325 = dma.done [#allocation10], 20480
        $region60: #{multi_phoc_forward.1} parent=43 // pred_fallthru
          _
        %s326 = sand.u32 %s35, 1
        %s327 = scalar_lea.sflag [#allocation4], %s326
        %s328 = sand.u32 %s35, 1
        %s329 = smul.addr %s328, 128
        %s330 = scalar_lea.vmem [#allocation3], %s329
        %p331 = pneg %p48
        %p332 = pneg %p45
        %s333 = sand.u32 %s27, 1
        %s334 = scalar_lea.sflag [#allocation7], %s333
        %s335 = sand.u32 %s61, 1
        %s336 = smul.addr %s335, 160
        %s337 = scalar_lea.vmem [#allocation6], %s336
        %p338 = pneg %p74
        %p339 = pneg %p71
        %p340 = pneg %p95
        %p341 = pneg %p92
        %p342 = pneg %p116
        %p343 = pneg %p113
        %p344 = pneg %p137
        %p345 = pneg %p134
        %p346 = pneg %p158
        %p347 = pneg %p155
        %p348 = pneg %p184
        %p349 = pneg %p181
        %s350 = sand.u32 %s171, 1
        %s351 = scalar_lea.sflag [#allocation5], %s350
        %s352 = sand.u32 %s171, 1
        %s353 = smul.addr %s352, 128
        %s354 = scalar_lea.vmem [#allocation11], %s353
        %s355 = smul.u32 4, %s27
        %s356 = ssub.s32 5, %s355
        %p357 = scmp.lt.s32.totalorder %s356, 4
        %s358 = scalar_select %p357, %s356, 4
        %s359 = smul.u32 128, %s358
        %s360 = smul.u32 %s359, 4
        %s361 = smul.u32 4, %s27
        %s362 = ssub.s32 5, %s361
        %p363 = scmp.lt.s32.totalorder %s362, 4
        %s364 = scalar_select %p363, %s362, 4
        %s365 = smul.u32 128, %s364
        %s366 = smul.u32 %s365, 5
        %s367 = smul.u32 4, %s27
        %s368 = ssub.s32 5, %s367
        %p369 = scmp.lt.s32.totalorder %s368, 4
        %s370 = scalar_select %p369, %s368, 4
        %s371 = smul.u32 128, %s370
        %s372 = smul.u32 %s371, 4
        %v374 = vld [vmem:[%s304] sm:$0xff]
        %v375 = vld [vmem:[%s304 + $0x8] sm:$0xff]
        %v376 = vld [vmem:[%s304 + $0x10] sm:$0xff]
        %v377 = vld [vmem:[%s304 + $0x18] sm:$0xff]
        %v378 = vld [vmem:[%s304 + $0x20] sm:$0xff]
        %v379 = vld [vmem:[%s304 + $0x28] sm:$0xff]
        %v380 = vld [vmem:[%s304 + $0x30] sm:$0xff]
        %v381 = vld [vmem:[%s304 + $0x38] sm:$0xff]
        %v382 = vld [vmem:[%s304 + $0x40] sm:$0xff]
        %v383 = vld [vmem:[%s304 + $0x48] sm:$0xff]
        %v384 = vld [vmem:[%s304 + $0x50] sm:$0xff]
        %v385 = vld [vmem:[%s304 + $0x58] sm:$0xff]
        %v386 = vld [vmem:[%s304 + $0x60] sm:$0xff]
        %v387 = vld [vmem:[%s304 + $0x68] sm:$0xff]
        %v388 = vld [vmem:[%s304 + $0x70] sm:$0xff]
        %v389 = vld [vmem:[%s304 + $0x78] sm:$0xff]
        %v390 = vpack.c.bf16 %v378, %v374
        %v391 = vpack.c.bf16 %v379, %v375
        %v392 = vpack.c.bf16 %v380, %v376
        %v393 = vpack.c.bf16 %v381, %v377
        %v394 = vpack.c.bf16 %v386, %v382
        %v395 = vpack.c.bf16 %v387, %v383
        %v396 = vpack.c.bf16 %v388, %v384
        %v397 = vpack.c.bf16 %v389, %v385
        %v398 = vld [vmem:[#allocation8] sm:$0xff]
        %v399 = vld [vmem:[#allocation8 + $0x8] sm:$0xff]
        %v400 = vld [vmem:[#allocation8 + $0x10] sm:$0xf]
        %v401 = vld [vmem:[#allocation8 + $0x14] sm:$0xff]
        %v402 = vld [vmem:[#allocation8 + $0x1c] sm:$0xff]
        %v403 = vld [vmem:[#allocation8 + $0x24] sm:$0xf]
        %v404 = vld [vmem:[#allocation8 + $0x28] sm:$0xff]
        %v405 = vld [vmem:[#allocation8 + $0x30] sm:$0xff]
        %v406 = vld [vmem:[#allocation8 + $0x38] sm:$0xf]
        %v407 = vld [vmem:[#allocation8 + $0x3c] sm:$0xff]
        %v408 = vld [vmem:[#allocation8 + $0x44] sm:$0xff]
        %v409 = vld [vmem:[#allocation8 + $0x4c] sm:$0xf]
        %v410 = vld [vmem:[#allocation8 + $0x50] sm:$0xff]
        %v411 = vld [vmem:[#allocation8 + $0x58] sm:$0xff]
        %v412 = vld [vmem:[#allocation8 + $0x60] sm:$0xf]
        %v413 = vld [vmem:[#allocation8 + $0x64] sm:$0xff]
        %v414 = vld [vmem:[#allocation8 + $0x6c] sm:$0xff]
        %v415 = vld [vmem:[#allocation8 + $0x74] sm:$0xf]
        %v416 = vld [vmem:[#allocation8 + $0x78] sm:$0xff]
        %v417 = vld [vmem:[#allocation8 + $0x80] sm:$0xff]
        %v418 = vld [vmem:[#allocation8 + $0x88] sm:$0xf]
        %v419 = vld [vmem:[#allocation8 + $0x8c] sm:$0xff]
        %v420 = vld [vmem:[#allocation8 + $0x94] sm:$0xff]
        %v421 = vld [vmem:[#allocation8 + $0x9c] sm:$0xf]
        %v422 = vld [vmem:[#allocation8 + $0xa0] sm:$0xff]
        %v423 = vld [vmem:[#allocation8 + $0xa8] sm:$0xff]
        %v424 = vld [vmem:[#allocation8 + $0xb0] sm:$0xf]
        %v425 = vld [vmem:[#allocation8 + $0xb4] sm:$0xff]
        %v426 = vld [vmem:[#allocation8 + $0xbc] sm:$0xff]
        %v427 = vld [vmem:[#allocation8 + $0xc4] sm:$0xf]
        %v428 = vld [vmem:[#allocation8 + $0xc8] sm:$0xff]
        %v429 = vld [vmem:[#allocation8 + $0xd0] sm:$0xff]
        %v430 = vld [vmem:[#allocation8 + $0xd8] sm:$0xf]
        %v431 = vld [vmem:[#allocation8 + $0xdc] sm:$0xff]
        %v432 = vld [vmem:[#allocation8 + $0xe4] sm:$0xff]
        %v433 = vld [vmem:[#allocation8 + $0xec] sm:$0xf]
        %v434 = vld [vmem:[#allocation8 + $0xf0] sm:$0xff]
        %v435 = vld [vmem:[#allocation8 + $0xf8] sm:$0xff]
        %v436 = vld [vmem:[#allocation8 + $0x100] sm:$0xf]
        %v437 = vld [vmem:[#allocation8 + $0x104] sm:$0xff]
        %v438 = vld [vmem:[#allocation8 + $0x10c] sm:$0xff]
        %v439 = vld [vmem:[#allocation8 + $0x114] sm:$0xf]
        %v440 = vld [vmem:[#allocation8 + $0x118] sm:$0xff]
        %v441 = vld [vmem:[#allocation8 + $0x120] sm:$0xff]
        %v442 = vld [vmem:[#allocation8 + $0x128] sm:$0xf]
        %v443 = vld [vmem:[#allocation8 + $0x12c] sm:$0xff]
        %v444 = vld [vmem:[#allocation8 + $0x134] sm:$0xff]
        %v445 = vld [vmem:[#allocation8 + $0x13c] sm:$0xf]
        %v446 = vld [vmem:[#allocation8 + $0x140] sm:$0xff]
        %v447 = vld [vmem:[#allocation8 + $0x148] sm:$0xff]
        %v448 = vld [vmem:[#allocation8 + $0x150] sm:$0xf]
        %v449 = vld [vmem:[#allocation8 + $0x154] sm:$0xff]
        %v450 = vld [vmem:[#allocation8 + $0x15c] sm:$0xff]
        %v451 = vld [vmem:[#allocation8 + $0x164] sm:$0xf]
        %v452 = vld [vmem:[#allocation8 + $0x168] sm:$0xff]
        %v453 = vld [vmem:[#allocation8 + $0x170] sm:$0xff]
        %v454 = vld [vmem:[#allocation8 + $0x178] sm:$0xf]
        %v455 = vld [vmem:[#allocation8 + $0x17c] sm:$0xff]
        %v456 = vld [vmem:[#allocation8 + $0x184] sm:$0xff]
        %v457 = vld [vmem:[#allocation8 + $0x18c] sm:$0xf]
        %v458 = vld [vmem:[#allocation8 + $0x190] sm:$0xff]
        %v459 = vld [vmem:[#allocation8 + $0x198] sm:$0xff]
        %v460 = vld [vmem:[#allocation8 + $0x1a0] sm:$0xf]
        %v461 = vld [vmem:[#allocation8 + $0x1a4] sm:$0xff]
        %v462 = vld [vmem:[#allocation8 + $0x1ac] sm:$0xff]
        %v463 = vld [vmem:[#allocation8 + $0x1b4] sm:$0xf]
        %v464 = vld [vmem:[#allocation8 + $0x1b8] sm:$0xff]
        %v465 = vld [vmem:[#allocation8 + $0x1c0] sm:$0xff]
        %v466 = vld [vmem:[#allocation8 + $0x1c8] sm:$0xf]
        %v467 = vld [vmem:[#allocation8 + $0x1cc] sm:$0xff]
        %v468 = vld [vmem:[#allocation8 + $0x1d4] sm:$0xff]
        %v469 = vld [vmem:[#allocation8 + $0x1dc] sm:$0xf]
        %v470 = vld [vmem:[#allocation8 + $0x1e0] sm:$0xff]
        %v471 = vld [vmem:[#allocation8 + $0x1e8] sm:$0xff]
        %v472 = vld [vmem:[#allocation8 + $0x1f0] sm:$0xf]
        %v473 = vld [vmem:[#allocation8 + $0x1f4] sm:$0xff]
        %v474 = vld [vmem:[#allocation8 + $0x1fc] sm:$0xff]
        %v475 = vld [vmem:[#allocation8 + $0x204] sm:$0xf]
        %v476 = vld [vmem:[#allocation8 + $0x208] sm:$0xff]
        %v477 = vld [vmem:[#allocation8 + $0x210] sm:$0xff]
        %v478 = vld [vmem:[#allocation8 + $0x218] sm:$0xf]
        %v479 = vld [vmem:[#allocation8 + $0x21c] sm:$0xff]
        %v480 = vld [vmem:[#allocation8 + $0x224] sm:$0xff]
        %v481 = vld [vmem:[#allocation8 + $0x22c] sm:$0xf]
        %v482 = vld [vmem:[#allocation8 + $0x230] sm:$0xff]
        %v483 = vld [vmem:[#allocation8 + $0x238] sm:$0xff]
        %v484 = vld [vmem:[#allocation8 + $0x240] sm:$0xf]
        %v485 = vld [vmem:[#allocation8 + $0x244] sm:$0xff]
        %v486 = vld [vmem:[#allocation8 + $0x24c] sm:$0xff]
        %v487 = vld [vmem:[#allocation8 + $0x254] sm:$0xf]
        %v488 = vld [vmem:[#allocation8 + $0x258] sm:$0xff]
        %v489 = vld [vmem:[#allocation8 + $0x260] sm:$0xff]
        %v490 = vld [vmem:[#allocation8 + $0x268] sm:$0xf]
        %v491 = vld [vmem:[#allocation8 + $0x26c] sm:$0xff]
        %v492 = vld [vmem:[#allocation8 + $0x274] sm:$0xff]
        %v493 = vld [vmem:[#allocation8 + $0x27c] sm:$0xf]
        %v494 = vld [vmem:[#allocation8 + $0x280] sm:$0xff]
        %v495 = vld [vmem:[#allocation8 + $0x288] sm:$0xff]
        %v496 = vld [vmem:[#allocation8 + $0x290] sm:$0xf]
        %v497 = vld [vmem:[#allocation8 + $0x294] sm:$0xff]
        %v498 = vld [vmem:[#allocation8 + $0x29c] sm:$0xff]
        %v499 = vld [vmem:[#allocation8 + $0x2a4] sm:$0xf]
        %v500 = vld [vmem:[#allocation8 + $0x2a8] sm:$0xff]
        %v501 = vld [vmem:[#allocation8 + $0x2b0] sm:$0xff]
        %v502 = vld [vmem:[#allocation8 + $0x2b8] sm:$0xf]
        %v503 = vld [vmem:[#allocation8 + $0x2bc] sm:$0xff]
        %v504 = vld [vmem:[#allocation8 + $0x2c4] sm:$0xff]
        %v505 = vld [vmem:[#allocation8 + $0x2cc] sm:$0xf]
        %v506 = vld [vmem:[#allocation8 + $0x2d0] sm:$0xff]
        %v507 = vld [vmem:[#allocation8 + $0x2d8] sm:$0xff]
        %v508 = vld [vmem:[#allocation8 + $0x2e0] sm:$0xf]
        %v509 = vld [vmem:[#allocation8 + $0x2e4] sm:$0xff]
        %v510 = vld [vmem:[#allocation8 + $0x2ec] sm:$0xff]
        %v511 = vld [vmem:[#allocation8 + $0x2f4] sm:$0xf]
        %v512 = vld [vmem:[#allocation8 + $0x2f8] sm:$0xff]
        %v513 = vld [vmem:[#allocation8 + $0x300] sm:$0xff]
        %v514 = vld [vmem:[#allocation8 + $0x308] sm:$0xf]
        %v515 = vld [vmem:[#allocation8 + $0x30c] sm:$0xff]
        %v516 = vld [vmem:[#allocation8 + $0x314] sm:$0xff]
        %v517 = vld [vmem:[#allocation8 + $0x31c] sm:$0xf]
        %v518 = vld [vmem:[#allocation8 + $0x320] sm:$0xff]
        %v519 = vld [vmem:[#allocation8 + $0x328] sm:$0xff]
        %v520 = vld [vmem:[#allocation8 + $0x330] sm:$0xf]
        %v521 = vld [vmem:[#allocation8 + $0x334] sm:$0xff]
        %v522 = vld [vmem:[#allocation8 + $0x33c] sm:$0xff]
        %v523 = vld [vmem:[#allocation8 + $0x344] sm:$0xf]
        %v524 = vld [vmem:[#allocation8 + $0x348] sm:$0xff]
        %v525 = vld [vmem:[#allocation8 + $0x350] sm:$0xff]
        %v526 = vld [vmem:[#allocation8 + $0x358] sm:$0xf]
        %v527 = vld [vmem:[#allocation8 + $0x35c] sm:$0xff]
        %v528 = vld [vmem:[#allocation8 + $0x364] sm:$0xff]
        %v529 = vld [vmem:[#allocation8 + $0x36c] sm:$0xf]
        %v530 = vld [vmem:[#allocation8 + $0x370] sm:$0xff]
        %v531 = vld [vmem:[#allocation8 + $0x378] sm:$0xff]
        %v532 = vld [vmem:[#allocation8 + $0x380] sm:$0xf]
        %v533 = vld [vmem:[#allocation8 + $0x384] sm:$0xff]
        %v534 = vld [vmem:[#allocation8 + $0x38c] sm:$0xff]
        %v535 = vld [vmem:[#allocation8 + $0x394] sm:$0xf]
        %v536 = vld [vmem:[#allocation8 + $0x398] sm:$0xff]
        %v537 = vld [vmem:[#allocation8 + $0x3a0] sm:$0xff]
        %v538 = vld [vmem:[#allocation8 + $0x3a8] sm:$0xf]
        %v539 = vld [vmem:[#allocation8 + $0x3ac] sm:$0xff]
        %v540 = vld [vmem:[#allocation8 + $0x3b4] sm:$0xff]
        %v541 = vld [vmem:[#allocation8 + $0x3bc] sm:$0xf]
        %v542 = vld [vmem:[#allocation8 + $0x3c0] sm:$0xff]
        %v543 = vld [vmem:[#allocation8 + $0x3c8] sm:$0xff]
        %v544 = vld [vmem:[#allocation8 + $0x3d0] sm:$0xf]
        %v545 = vld [vmem:[#allocation8 + $0x3d4] sm:$0xff]
        %v546 = vld [vmem:[#allocation8 + $0x3dc] sm:$0xff]
        %v547 = vld [vmem:[#allocation8 + $0x3e4] sm:$0xf]
        %v548 = vld [vmem:[#allocation8 + $0x3e8] sm:$0xff]
        %v549 = vld [vmem:[#allocation8 + $0x3f0] sm:$0xff]
        %v550 = vld [vmem:[#allocation8 + $0x3f8] sm:$0xf]
        %v551 = vld [vmem:[#allocation8 + $0x3fc] sm:$0xff]
        %v552 = vld [vmem:[#allocation8 + $0x404] sm:$0xff]
        %v553 = vld [vmem:[#allocation8 + $0x40c] sm:$0xf]
        %v554 = vld [vmem:[#allocation8 + $0x410] sm:$0xff]
        %v555 = vld [vmem:[#allocation8 + $0x418] sm:$0xff]
        %v556 = vld [vmem:[#allocation8 + $0x420] sm:$0xf]
        %v557 = vld [vmem:[#allocation8 + $0x424] sm:$0xff]
        %v558 = vld [vmem:[#allocation8 + $0x42c] sm:$0xff]
        %v559 = vld [vmem:[#allocation8 + $0x434] sm:$0xf]
        %v560 = vld [vmem:[#allocation8 + $0x438] sm:$0xff]
        %v561 = vld [vmem:[#allocation8 + $0x440] sm:$0xff]
        %v562 = vld [vmem:[#allocation8 + $0x448] sm:$0xf]
        %v563 = vld [vmem:[#allocation8 + $0x44c] sm:$0xff]
        %v564 = vld [vmem:[#allocation8 + $0x454] sm:$0xff]
        %v565 = vld [vmem:[#allocation8 + $0x45c] sm:$0xf]
        %v566 = vld [vmem:[#allocation8 + $0x460] sm:$0xff]
        %v567 = vld [vmem:[#allocation8 + $0x468] sm:$0xff]
        %v568 = vld [vmem:[#allocation8 + $0x470] sm:$0xf]
        %v569 = vld [vmem:[#allocation8 + $0x474] sm:$0xff]
        %v570 = vld [vmem:[#allocation8 + $0x47c] sm:$0xff]
        %v571 = vld [vmem:[#allocation8 + $0x484] sm:$0xf]
        %v572 = vld [vmem:[#allocation8 + $0x488] sm:$0xff]
        %v573 = vld [vmem:[#allocation8 + $0x490] sm:$0xff]
        %v574 = vld [vmem:[#allocation8 + $0x498] sm:$0xf]
        %v575 = vld [vmem:[#allocation8 + $0x49c] sm:$0xff]
        %v576 = vld [vmem:[#allocation8 + $0x4a4] sm:$0xff]
        %v577 = vld [vmem:[#allocation8 + $0x4ac] sm:$0xf]
        %v578 = vld [vmem:[#allocation8 + $0x4b0] sm:$0xff]
        %v579 = vld [vmem:[#allocation8 + $0x4b8] sm:$0xff]
        %v580 = vld [vmem:[#allocation8 + $0x4c0] sm:$0xf]
        %v581 = vld [vmem:[#allocation8 + $0x4c4] sm:$0xff]
        %v582 = vld [vmem:[#allocation8 + $0x4cc] sm:$0xff]
        %v583 = vld [vmem:[#allocation8 + $0x4d4] sm:$0xf]
        %v584 = vld [vmem:[#allocation8 + $0x4d8] sm:$0xff]
        %v585 = vld [vmem:[#allocation8 + $0x4e0] sm:$0xff]
        %v586 = vld [vmem:[#allocation8 + $0x4e8] sm:$0xf]
        %v587 = vld [vmem:[#allocation8 + $0x4ec] sm:$0xff]
        %v588 = vld [vmem:[#allocation8 + $0x4f4] sm:$0xff]
        %v589 = vld [vmem:[#allocation8 + $0x4fc] sm:$0xf]
        %v590 = vld [vmem:[%s3] sm:$0x1f]
        %v592 = vlaneseq
        %v593 = vshrl.u32 %v592, 7
        %v594 = vsub.s32 0, %v593
        %v595 = vrot.slane %v590, %v594
        %v596 = vlaneseq
        %v597 = vshrl.u32 %v596, 7
        %v598 = vsub.s32 1, %v597
        %v599 = vrot.slane %v590, %v598
        %v600 = vlaneseq
        %v601 = vshrl.u32 %v600, 7
        %v602 = vsub.s32 2, %v601
        %v603 = vrot.slane %v590, %v602
        %v604 = vlaneseq
        %v605 = vshrl.u32 %v604, 7
        %v606 = vsub.s32 3, %v605
        %v607 = vrot.slane %v590, %v606
        %v608 = vlaneseq
        %v609 = vshrl.u32 %v608, 7
        %v610 = vsub.s32 4, %v609
        %v611 = vrot.slane %v590, %v610
        %v809 = vunpack.c.l.b16 %v398
        %v810 = vunpack.c.h.b16 %v398
        %v811 = vunpack.c.l.b16 %v399
        %v812 = vunpack.c.h.b16 %v399
        %v813 = vunpack.c.l.b16 %v400
        %v814 = vunpack.c.l.b16 %v401
        %v815 = vunpack.c.h.b16 %v401
        %v816 = vunpack.c.l.b16 %v402
        %v817 = vunpack.c.h.b16 %v402
        %v818 = vunpack.c.l.b16 %v403
        %v819 = vunpack.c.l.b16 %v404
        %v820 = vunpack.c.h.b16 %v404
        %v821 = vunpack.c.l.b16 %v405
        %v822 = vunpack.c.h.b16 %v405
        %v823 = vunpack.c.l.b16 %v406
        %v824 = vunpack.c.l.b16 %v407
        %v825 = vunpack.c.h.b16 %v407
        %v826 = vunpack.c.l.b16 %v408
        %v827 = vunpack.c.h.b16 %v408
        %v828 = vunpack.c.l.b16 %v409
        %v829 = vunpack.c.l.b16 %v410
        %v830 = vunpack.c.h.b16 %v410
        %v831 = vunpack.c.l.b16 %v411
        %v832 = vunpack.c.h.b16 %v411
        %v833 = vunpack.c.l.b16 %v412
        %v834 = vunpack.c.l.b16 %v413
        %v835 = vunpack.c.h.b16 %v413
        %v836 = vunpack.c.l.b16 %v414
        %v837 = vunpack.c.h.b16 %v414
        %v838 = vunpack.c.l.b16 %v415
        %v839 = vunpack.c.l.b16 %v416
        %v840 = vunpack.c.h.b16 %v416
        %v841 = vunpack.c.l.b16 %v417
        %v842 = vunpack.c.h.b16 %v417
        %v843 = vunpack.c.l.b16 %v418
        %v844 = vunpack.c.l.b16 %v419
        %v845 = vunpack.c.h.b16 %v419
        %v846 = vunpack.c.l.b16 %v420
        %v847 = vunpack.c.h.b16 %v420
        %v848 = vunpack.c.l.b16 %v421
        %v849 = vunpack.c.l.b16 %v422
        %v850 = vunpack.c.h.b16 %v422
        %v851 = vunpack.c.l.b16 %v423
        %v852 = vunpack.c.h.b16 %v423
        %v853 = vunpack.c.l.b16 %v424
        %v854 = vunpack.c.l.b16 %v425
        %v855 = vunpack.c.h.b16 %v425
        %v856 = vunpack.c.l.b16 %v426
        %v857 = vunpack.c.h.b16 %v426
        %v858 = vunpack.c.l.b16 %v427
        %v859 = vunpack.c.l.b16 %v428
        %v860 = vunpack.c.h.b16 %v428
        %v861 = vunpack.c.l.b16 %v429
        %v862 = vunpack.c.h.b16 %v429
        %v863 = vunpack.c.l.b16 %v430
        %v864 = vunpack.c.l.b16 %v431
        %v865 = vunpack.c.h.b16 %v431
        %v866 = vunpack.c.l.b16 %v432
        %v867 = vunpack.c.h.b16 %v432
        %v868 = vunpack.c.l.b16 %v433
        %v869 = vunpack.c.l.b16 %v434
        %v870 = vunpack.c.h.b16 %v434
        %v871 = vunpack.c.l.b16 %v435
        %v872 = vunpack.c.h.b16 %v435
        %v873 = vunpack.c.l.b16 %v436
        %v874 = vunpack.c.l.b16 %v437
        %v875 = vunpack.c.h.b16 %v437
        %v876 = vunpack.c.l.b16 %v438
        %v877 = vunpack.c.h.b16 %v438
        %v878 = vunpack.c.l.b16 %v439
        %v879 = vunpack.c.l.b16 %v440
        %v880 = vunpack.c.h.b16 %v440
        %v881 = vunpack.c.l.b16 %v441
        %v882 = vunpack.c.h.b16 %v441
        %v883 = vunpack.c.l.b16 %v442
        %v884 = vunpack.c.l.b16 %v443
        %v885 = vunpack.c.h.b16 %v443
        %v886 = vunpack.c.l.b16 %v444
        %v887 = vunpack.c.h.b16 %v444
        %v888 = vunpack.c.l.b16 %v445
        %v889 = vunpack.c.l.b16 %v446
        %v890 = vunpack.c.h.b16 %v446
        %v891 = vunpack.c.l.b16 %v447
        %v892 = vunpack.c.h.b16 %v447
        %v893 = vunpack.c.l.b16 %v448
        %v894 = vunpack.c.l.b16 %v449
        %v895 = vunpack.c.h.b16 %v449
        %v896 = vunpack.c.l.b16 %v450
        %v897 = vunpack.c.h.b16 %v450
        %v898 = vunpack.c.l.b16 %v451
        %v899 = vunpack.c.l.b16 %v452
        %v900 = vunpack.c.h.b16 %v452
        %v901 = vunpack.c.l.b16 %v453
        %v902 = vunpack.c.h.b16 %v453
        %v903 = vunpack.c.l.b16 %v454
        %v904 = vunpack.c.l.b16 %v455
        %v905 = vunpack.c.h.b16 %v455
        %v906 = vunpack.c.l.b16 %v456
        %v907 = vunpack.c.h.b16 %v456
        %v908 = vunpack.c.l.b16 %v457
        %v909 = vunpack.c.l.b16 %v458
        %v910 = vunpack.c.h.b16 %v458
        %v911 = vunpack.c.l.b16 %v459
        %v912 = vunpack.c.h.b16 %v459
        %v913 = vunpack.c.l.b16 %v460
        %v914 = vunpack.c.l.b16 %v461
        %v915 = vunpack.c.h.b16 %v461
        %v916 = vunpack.c.l.b16 %v462
        %v917 = vunpack.c.h.b16 %v462
        %v918 = vunpack.c.l.b16 %v463
        %v919 = vunpack.c.l.b16 %v464
        %v920 = vunpack.c.h.b16 %v464
        %v921 = vunpack.c.l.b16 %v465
        %v922 = vunpack.c.h.b16 %v465
        %v923 = vunpack.c.l.b16 %v466
        %v924 = vunpack.c.l.b16 %v467
        %v925 = vunpack.c.h.b16 %v467
        %v926 = vunpack.c.l.b16 %v468
        %v927 = vunpack.c.h.b16 %v468
        %v928 = vunpack.c.l.b16 %v469
        %v929 = vunpack.c.l.b16 %v470
        %v930 = vunpack.c.h.b16 %v470
        %v931 = vunpack.c.l.b16 %v471
        %v932 = vunpack.c.h.b16 %v471
        %v933 = vunpack.c.l.b16 %v472
        %v934 = vunpack.c.l.b16 %v473
        %v935 = vunpack.c.h.b16 %v473
        %v936 = vunpack.c.l.b16 %v474
        %v937 = vunpack.c.h.b16 %v474
        %v938 = vunpack.c.l.b16 %v475
        %v939 = vunpack.c.l.b16 %v476
        %v940 = vunpack.c.h.b16 %v476
        %v941 = vunpack.c.l.b16 %v477
        %v942 = vunpack.c.h.b16 %v477
        %v943 = vunpack.c.l.b16 %v478
        %v944 = vunpack.c.l.b16 %v479
        %v945 = vunpack.c.h.b16 %v479
        %v946 = vunpack.c.l.b16 %v480
        %v947 = vunpack.c.h.b16 %v480
        %v948 = vunpack.c.l.b16 %v481
        %v949 = vunpack.c.l.b16 %v482
        %v950 = vunpack.c.h.b16 %v482
        %v951 = vunpack.c.l.b16 %v483
        %v952 = vunpack.c.h.b16 %v483
        %v953 = vunpack.c.l.b16 %v484
        %v954 = vunpack.c.l.b16 %v485
        %v955 = vunpack.c.h.b16 %v485
        %v956 = vunpack.c.l.b16 %v486
        %v957 = vunpack.c.h.b16 %v486
        %v958 = vunpack.c.l.b16 %v487
        %v959 = vunpack.c.l.b16 %v488
        %v960 = vunpack.c.h.b16 %v488
        %v961 = vunpack.c.l.b16 %v489
        %v962 = vunpack.c.h.b16 %v489
        %v963 = vunpack.c.l.b16 %v490
        %v964 = vunpack.c.l.b16 %v491
        %v965 = vunpack.c.h.b16 %v491
        %v966 = vunpack.c.l.b16 %v492
        %v967 = vunpack.c.h.b16 %v492
        %v968 = vunpack.c.l.b16 %v493
        %v969 = vunpack.c.l.b16 %v494
        %v970 = vunpack.c.h.b16 %v494
        %v971 = vunpack.c.l.b16 %v495
        %v972 = vunpack.c.h.b16 %v495
        %v973 = vunpack.c.l.b16 %v496
        %v974 = vunpack.c.l.b16 %v497
        %v975 = vunpack.c.h.b16 %v497
        %v976 = vunpack.c.l.b16 %v498
        %v977 = vunpack.c.h.b16 %v498
        %v978 = vunpack.c.l.b16 %v499
        %v979 = vunpack.c.l.b16 %v500
        %v980 = vunpack.c.h.b16 %v500
        %v981 = vunpack.c.l.b16 %v501
        %v982 = vunpack.c.h.b16 %v501
        %v983 = vunpack.c.l.b16 %v502
        %v984 = vunpack.c.l.b16 %v503
        %v985 = vunpack.c.h.b16 %v503
        %v986 = vunpack.c.l.b16 %v504
        %v987 = vunpack.c.h.b16 %v504
        %v988 = vunpack.c.l.b16 %v505
        %v989 = vunpack.c.l.b16 %v506
        %v990 = vunpack.c.h.b16 %v506
        %v991 = vunpack.c.l.b16 %v507
        %v992 = vunpack.c.h.b16 %v507
        %v993 = vunpack.c.l.b16 %v508
        %v994 = vunpack.c.l.b16 %v509
        %v995 = vunpack.c.h.b16 %v509
        %v996 = vunpack.c.l.b16 %v510
        %v997 = vunpack.c.h.b16 %v510
        %v998 = vunpack.c.l.b16 %v511
        %v999 = vunpack.c.l.b16 %v512
        %v1000 = vunpack.c.h.b16 %v512
        %v1001 = vunpack.c.l.b16 %v513
        %v1002 = vunpack.c.h.b16 %v513
        %v1003 = vunpack.c.l.b16 %v514
        %v1004 = vunpack.c.l.b16 %v515
        %v1005 = vunpack.c.h.b16 %v515
        %v1006 = vunpack.c.l.b16 %v516
        %v1007 = vunpack.c.h.b16 %v516
        %v1008 = vunpack.c.l.b16 %v517
        %v1009 = vunpack.c.l.b16 %v518
        %v1010 = vunpack.c.h.b16 %v518
        %v1011 = vunpack.c.l.b16 %v519
        %v1012 = vunpack.c.h.b16 %v519
        %v1013 = vunpack.c.l.b16 %v520
        %v1014 = vunpack.c.l.b16 %v521
        %v1015 = vunpack.c.h.b16 %v521
        %v1016 = vunpack.c.l.b16 %v522
        %v1017 = vunpack.c.h.b16 %v522
        %v1018 = vunpack.c.l.b16 %v523
        %v1019 = vunpack.c.l.b16 %v524
        %v1020 = vunpack.c.h.b16 %v524
        %v1021 = vunpack.c.l.b16 %v525
        %v1022 = vunpack.c.h.b16 %v525
        %v1023 = vunpack.c.l.b16 %v526
        %v1024 = vunpack.c.l.b16 %v527
        %v1025 = vunpack.c.h.b16 %v527
        %v1026 = vunpack.c.l.b16 %v528
        %v1027 = vunpack.c.h.b16 %v528
        %v1028 = vunpack.c.l.b16 %v529
        %v1029 = vunpack.c.l.b16 %v530
        %v1030 = vunpack.c.h.b16 %v530
        %v1031 = vunpack.c.l.b16 %v531
        %v1032 = vunpack.c.h.b16 %v531
        %v1033 = vunpack.c.l.b16 %v532
        %v1034 = vunpack.c.l.b16 %v533
        %v1035 = vunpack.c.h.b16 %v533
        %v1036 = vunpack.c.l.b16 %v534
        %v1037 = vunpack.c.h.b16 %v534
        %v1038 = vunpack.c.l.b16 %v535
        %v1039 = vunpack.c.l.b16 %v536
        %v1040 = vunpack.c.h.b16 %v536
        %v1041 = vunpack.c.l.b16 %v537
        %v1042 = vunpack.c.h.b16 %v537
        %v1043 = vunpack.c.l.b16 %v538
        %v1044 = vunpack.c.l.b16 %v539
        %v1045 = vunpack.c.h.b16 %v539
        %v1046 = vunpack.c.l.b16 %v540
        %v1047 = vunpack.c.h.b16 %v540
        %v1048 = vunpack.c.l.b16 %v541
        %v1049 = vunpack.c.l.b16 %v542
        %v1050 = vunpack.c.h.b16 %v542
        %v1051 = vunpack.c.l.b16 %v543
        %v1052 = vunpack.c.h.b16 %v543
        %v1053 = vunpack.c.l.b16 %v544
        %v1054 = vunpack.c.l.b16 %v545
        %v1055 = vunpack.c.h.b16 %v545
        %v1056 = vunpack.c.l.b16 %v546
        %v1057 = vunpack.c.h.b16 %v546
        %v1058 = vunpack.c.l.b16 %v547
        %v1059 = vunpack.c.l.b16 %v548
        %v1060 = vunpack.c.h.b16 %v548
        %v1061 = vunpack.c.l.b16 %v549
        %v1062 = vunpack.c.h.b16 %v549
        %v1063 = vunpack.c.l.b16 %v550
        %v1064 = vunpack.c.l.b16 %v551
        %v1065 = vunpack.c.h.b16 %v551
        %v1066 = vunpack.c.l.b16 %v552
        %v1067 = vunpack.c.h.b16 %v552
        %v1068 = vunpack.c.l.b16 %v553
        %v1069 = vunpack.c.l.b16 %v554
        %v1070 = vunpack.c.h.b16 %v554
        %v1071 = vunpack.c.l.b16 %v555
        %v1072 = vunpack.c.h.b16 %v555
        %v1073 = vunpack.c.l.b16 %v556
        %v1074 = vunpack.c.l.b16 %v557
        %v1075 = vunpack.c.h.b16 %v557
        %v1076 = vunpack.c.l.b16 %v558
        %v1077 = vunpack.c.h.b16 %v558
        %v1078 = vunpack.c.l.b16 %v559
        %v1079 = vunpack.c.l.b16 %v560
        %v1080 = vunpack.c.h.b16 %v560
        %v1081 = vunpack.c.l.b16 %v561
        %v1082 = vunpack.c.h.b16 %v561
        %v1083 = vunpack.c.l.b16 %v562
        %v1084 = vunpack.c.l.b16 %v563
        %v1085 = vunpack.c.h.b16 %v563
        %v1086 = vunpack.c.l.b16 %v564
        %v1087 = vunpack.c.h.b16 %v564
        %v1088 = vunpack.c.l.b16 %v565
        %v1089 = vunpack.c.l.b16 %v566
        %v1090 = vunpack.c.h.b16 %v566
        %v1091 = vunpack.c.l.b16 %v567
        %v1092 = vunpack.c.h.b16 %v567
        %v1093 = vunpack.c.l.b16 %v568
        %v1094 = vunpack.c.l.b16 %v569
        %v1095 = vunpack.c.h.b16 %v569
        %v1096 = vunpack.c.l.b16 %v570
        %v1097 = vunpack.c.h.b16 %v570
        %v1098 = vunpack.c.l.b16 %v571
        %v1099 = vunpack.c.l.b16 %v572
        %v1100 = vunpack.c.h.b16 %v572
        %v1101 = vunpack.c.l.b16 %v573
        %v1102 = vunpack.c.h.b16 %v573
        %v1103 = vunpack.c.l.b16 %v574
        %v1104 = vunpack.c.l.b16 %v575
        %v1105 = vunpack.c.h.b16 %v575
        %v1106 = vunpack.c.l.b16 %v576
        %v1107 = vunpack.c.h.b16 %v576
        %v1108 = vunpack.c.l.b16 %v577
        %v1109 = vunpack.c.l.b16 %v578
        %v1110 = vunpack.c.h.b16 %v578
        %v1111 = vunpack.c.l.b16 %v579
        %v1112 = vunpack.c.h.b16 %v579
        %v1113 = vunpack.c.l.b16 %v580
        %v1114 = vunpack.c.l.b16 %v581
        %v1115 = vunpack.c.h.b16 %v581
        %v1116 = vunpack.c.l.b16 %v582
        %v1117 = vunpack.c.h.b16 %v582
        %v1118 = vunpack.c.l.b16 %v583
        %v1119 = vunpack.c.l.b16 %v584
        %v1120 = vunpack.c.h.b16 %v584
        %v1121 = vunpack.c.l.b16 %v585
        %v1122 = vunpack.c.h.b16 %v585
        %v1123 = vunpack.c.l.b16 %v586
        %v1124 = vunpack.c.l.b16 %v587
        %v1125 = vunpack.c.h.b16 %v587
        %v1126 = vunpack.c.l.b16 %v588
        %v1127 = vunpack.c.h.b16 %v588
        %v1128 = vunpack.c.l.b16 %v589
        %v1129 = vpack.c.b16 %v814, %v809
        %v1130 = vpack.c.b16 %v815, %v810
        %v1131 = vpack.c.b16 %v816, %v811
        %v1132 = vpack.c.b16 %v817, %v812
        %v1133 = vpack.c.b16 %v818, %v813
        %v1134 = vpack.c.b16 %v824, %v819
        %v1135 = vpack.c.b16 %v825, %v820
        %v1136 = vpack.c.b16 %v826, %v821
        %v1137 = vpack.c.b16 %v827, %v822
        %v1138 = vpack.c.b16 %v828, %v823
        %v1139 = vpack.c.b16 %v834, %v829
        %v1140 = vpack.c.b16 %v835, %v830
        %v1141 = vpack.c.b16 %v836, %v831
        %v1142 = vpack.c.b16 %v837, %v832
        %v1143 = vpack.c.b16 %v838, %v833
        %v1144 = vpack.c.b16 %v844, %v839
        %v1145 = vpack.c.b16 %v845, %v840
        %v1146 = vpack.c.b16 %v846, %v841
        %v1147 = vpack.c.b16 %v847, %v842
        %v1148 = vpack.c.b16 %v848, %v843
        %v1149 = vpack.c.b16 %v854, %v849
        %v1150 = vpack.c.b16 %v855, %v850
        %v1151 = vpack.c.b16 %v856, %v851
        %v1152 = vpack.c.b16 %v857, %v852
        %v1153 = vpack.c.b16 %v858, %v853
        %v1154 = vpack.c.b16 %v864, %v859
        %v1155 = vpack.c.b16 %v865, %v860
        %v1156 = vpack.c.b16 %v866, %v861
        %v1157 = vpack.c.b16 %v867, %v862
        %v1158 = vpack.c.b16 %v868, %v863
        %v1159 = vpack.c.b16 %v874, %v869
        %v1160 = vpack.c.b16 %v875, %v870
        %v1161 = vpack.c.b16 %v876, %v871
        %v1162 = vpack.c.b16 %v877, %v872
        %v1163 = vpack.c.b16 %v878, %v873
        %v1164 = vpack.c.b16 %v884, %v879
        %v1165 = vpack.c.b16 %v885, %v880
        %v1166 = vpack.c.b16 %v886, %v881
        %v1167 = vpack.c.b16 %v887, %v882
        %v1168 = vpack.c.b16 %v888, %v883
        %v1169 = vpack.c.b16 %v894, %v889
        %v1170 = vpack.c.b16 %v895, %v890
        %v1171 = vpack.c.b16 %v896, %v891
        %v1172 = vpack.c.b16 %v897, %v892
        %v1173 = vpack.c.b16 %v898, %v893
        %v1174 = vpack.c.b16 %v904, %v899
        %v1175 = vpack.c.b16 %v905, %v900
        %v1176 = vpack.c.b16 %v906, %v901
        %v1177 = vpack.c.b16 %v907, %v902
        %v1178 = vpack.c.b16 %v908, %v903
        %v1179 = vpack.c.b16 %v914, %v909
        %v1180 = vpack.c.b16 %v915, %v910
        %v1181 = vpack.c.b16 %v916, %v911
        %v1182 = vpack.c.b16 %v917, %v912
        %v1183 = vpack.c.b16 %v918, %v913
        %v1184 = vpack.c.b16 %v924, %v919
        %v1185 = vpack.c.b16 %v925, %v920
        %v1186 = vpack.c.b16 %v926, %v921
        %v1187 = vpack.c.b16 %v927, %v922
        %v1188 = vpack.c.b16 %v928, %v923
        %v1189 = vpack.c.b16 %v934, %v929
        %v1190 = vpack.c.b16 %v935, %v930
        %v1191 = vpack.c.b16 %v936, %v931
        %v1192 = vpack.c.b16 %v937, %v932
        %v1193 = vpack.c.b16 %v938, %v933
        %v1194 = vpack.c.b16 %v944, %v939
        %v1195 = vpack.c.b16 %v945, %v940
        %v1196 = vpack.c.b16 %v946, %v941
        %v1197 = vpack.c.b16 %v947, %v942
        %v1198 = vpack.c.b16 %v948, %v943
        %v1199 = vpack.c.b16 %v954, %v949
        %v1200 = vpack.c.b16 %v955, %v950
        %v1201 = vpack.c.b16 %v956, %v951
        %v1202 = vpack.c.b16 %v957, %v952
        %v1203 = vpack.c.b16 %v958, %v953
        %v1204 = vpack.c.b16 %v964, %v959
        %v1205 = vpack.c.b16 %v965, %v960
        %v1206 = vpack.c.b16 %v966, %v961
        %v1207 = vpack.c.b16 %v967, %v962
        %v1208 = vpack.c.b16 %v968, %v963
        %v1209 = vpack.c.b16 %v974, %v969
        %v1210 = vpack.c.b16 %v975, %v970
        %v1211 = vpack.c.b16 %v976, %v971
        %v1212 = vpack.c.b16 %v977, %v972
        %v1213 = vpack.c.b16 %v978, %v973
        %v1214 = vpack.c.b16 %v984, %v979
        %v1215 = vpack.c.b16 %v985, %v980
        %v1216 = vpack.c.b16 %v986, %v981
        %v1217 = vpack.c.b16 %v987, %v982
        %v1218 = vpack.c.b16 %v988, %v983
        %v1219 = vpack.c.b16 %v994, %v989
        %v1220 = vpack.c.b16 %v995, %v990
        %v1221 = vpack.c.b16 %v996, %v991
        %v1222 = vpack.c.b16 %v997, %v992
        %v1223 = vpack.c.b16 %v998, %v993
        %v1224 = vpack.c.b16 %v1004, %v999
        %v1225 = vpack.c.b16 %v1005, %v1000
        %v1226 = vpack.c.b16 %v1006, %v1001
        %v1227 = vpack.c.b16 %v1007, %v1002
        %v1228 = vpack.c.b16 %v1008, %v1003
        %v1229 = vpack.c.b16 %v1014, %v1009
        %v1230 = vpack.c.b16 %v1015, %v1010
        %v1231 = vpack.c.b16 %v1016, %v1011
        %v1232 = vpack.c.b16 %v1017, %v1012
        %v1233 = vpack.c.b16 %v1018, %v1013
        %v1234 = vpack.c.b16 %v1024, %v1019
        %v1235 = vpack.c.b16 %v1025, %v1020
        %v1236 = vpack.c.b16 %v1026, %v1021
        %v1237 = vpack.c.b16 %v1027, %v1022
        %v1238 = vpack.c.b16 %v1028, %v1023
        %v1239 = vpack.c.b16 %v1034, %v1029
        %v1240 = vpack.c.b16 %v1035, %v1030
        %v1241 = vpack.c.b16 %v1036, %v1031
        %v1242 = vpack.c.b16 %v1037, %v1032
        %v1243 = vpack.c.b16 %v1038, %v1033
        %v1244 = vpack.c.b16 %v1044, %v1039
        %v1245 = vpack.c.b16 %v1045, %v1040
        %v1246 = vpack.c.b16 %v1046, %v1041
        %v1247 = vpack.c.b16 %v1047, %v1042
        %v1248 = vpack.c.b16 %v1048, %v1043
        %v1249 = vpack.c.b16 %v1054, %v1049
        %v1250 = vpack.c.b16 %v1055, %v1050
        %v1251 = vpack.c.b16 %v1056, %v1051
        %v1252 = vpack.c.b16 %v1057, %v1052
        %v1253 = vpack.c.b16 %v1058, %v1053
        %v1254 = vpack.c.b16 %v1064, %v1059
        %v1255 = vpack.c.b16 %v1065, %v1060
        %v1256 = vpack.c.b16 %v1066, %v1061
        %v1257 = vpack.c.b16 %v1067, %v1062
        %v1258 = vpack.c.b16 %v1068, %v1063
        %v1259 = vpack.c.b16 %v1074, %v1069
        %v1260 = vpack.c.b16 %v1075, %v1070
        %v1261 = vpack.c.b16 %v1076, %v1071
        %v1262 = vpack.c.b16 %v1077, %v1072
        %v1263 = vpack.c.b16 %v1078, %v1073
        %v1264 = vpack.c.b16 %v1084, %v1079
        %v1265 = vpack.c.b16 %v1085, %v1080
        %v1266 = vpack.c.b16 %v1086, %v1081
        %v1267 = vpack.c.b16 %v1087, %v1082
        %v1268 = vpack.c.b16 %v1088, %v1083
        %v1269 = vpack.c.b16 %v1094, %v1089
        %v1270 = vpack.c.b16 %v1095, %v1090
        %v1271 = vpack.c.b16 %v1096, %v1091
        %v1272 = vpack.c.b16 %v1097, %v1092
        %v1273 = vpack.c.b16 %v1098, %v1093
        %v1274 = vpack.c.b16 %v1104, %v1099
        %v1275 = vpack.c.b16 %v1105, %v1100
        %v1276 = vpack.c.b16 %v1106, %v1101
        %v1277 = vpack.c.b16 %v1107, %v1102
        %v1278 = vpack.c.b16 %v1108, %v1103
        %v1279 = vpack.c.b16 %v1114, %v1109
        %v1280 = vpack.c.b16 %v1115, %v1110
        %v1281 = vpack.c.b16 %v1116, %v1111
        %v1282 = vpack.c.b16 %v1117, %v1112
        %v1283 = vpack.c.b16 %v1118, %v1113
        %v1284 = vpack.c.b16 %v1124, %v1119
        %v1285 = vpack.c.b16 %v1125, %v1120
        %v1286 = vpack.c.b16 %v1126, %v1121
        %v1287 = vpack.c.b16 %v1127, %v1122
        %v1288 = vpack.c.b16 %v1128, %v1123
        %1449 = vmatprep.subr.bf16.mxu0 %v1130
        %1450 = vmatpush1.bf16.msra.mxu0 %v1129
        %1451 = vmatprep.subr.bf16.mxu0 %v1135
        %1452 = vmatpush1.bf16.msra.mxu0 %v1134
        %1453 = vmatprep.subr.bf16.mxu0 %v1140
        %1454 = vmatpush1.bf16.msra.mxu0 %v1139
        %1455 = vmatprep.subr.bf16.mxu0 %v1145
        %1456 = vmatpush1.bf16.msra.mxu0 %v1144
        %1457 = vmatprep.subr.bf16.mxu0 %v1150
        %1458 = vmatpush1.bf16.msra.mxu0 %v1149
        %1459 = vmatprep.subr.bf16.mxu0 %v1155
        %1460 = vmatpush1.bf16.msra.mxu0 %v1154
        %1461 = vmatprep.subr.bf16.mxu0 %v1160
        %1462 = vmatpush1.bf16.msra.mxu0 %v1159
        %1463 = vmatprep.subr.bf16.mxu0 %v1165
        %1464 = vmatpush1.bf16.msra.mxu0 %v1164
        %1465 = vmatprep.subr.bf16.mxu0 %v1170
        %1466 = vmatpush1.bf16.msra.mxu0 %v1169
        %1467 = vmatprep.subr.bf16.mxu0 %v1175
        %1468 = vmatpush1.bf16.msra.mxu0 %v1174
        %1469 = vmatprep.subr.bf16.mxu0 %v1180
        %1470 = vmatpush1.bf16.msra.mxu0 %v1179
        %1471 = vmatprep.subr.bf16.mxu0 %v1185
        %1472 = vmatpush1.bf16.msra.mxu0 %v1184
        %1473 = vmatprep.subr.bf16.mxu0 %v1190
        %1474 = vmatpush1.bf16.msra.mxu0 %v1189
        %1475 = vmatprep.subr.bf16.mxu0 %v1195
        %1476 = vmatpush1.bf16.msra.mxu0 %v1194
        %1477 = vmatprep.subr.bf16.mxu0 %v1200
        %1478 = vmatpush1.bf16.msra.mxu0 %v1199
        %1479 = vmatprep.subr.bf16.mxu0 %v1205
        %1480 = vmatpush1.bf16.msra.mxu0 %v1204
        %1481 = vmatprep.mubr.bf16.mxu0 %v391
        %1482 = vmatmul.mubr.bf16.gmra.mrb[0].mxu0 %v390
        %v1483 = vpop.f32.mrb[0].mxu0
        %v1484 = vadd.f32 %v595, %v1483
        %v1485 = vpop.f32.mrb[0].mxu0
        %v1486 = vadd.f32 %v599, %v1485
        %v1487 = vpop.f32.mrb[0].mxu0
        %v1488 = vadd.f32 %v595, %v1487
        %v1489 = vpop.f32.mrb[0].mxu0
        %v1490 = vadd.f32 %v599, %v1489
        %1491 = vmatprep.mubr.bf16.mxu0 %v395
        %1492 = vmatmul.mubr.bf16.gmra.mrb[0].mxu0 %v394
        %v1493 = vpop.f32.mrb[0].mxu0
        %v1494 = vadd.f32 %v595, %v1493
        %v1495 = vpop.f32.mrb[0].mxu0
        %v1496 = vadd.f32 %v599, %v1495
        %v1497 = vpop.f32.mrb[0].mxu0
        %v1498 = vadd.f32 %v595, %v1497
        %v1499 = vpop.f32.mrb[0].mxu0
        %v1500 = vadd.f32 %v599, %v1499
        %1501 = vdwg.mxu0
        %1502 = vmatprep.subr.bf16.mxu0 %v1210
        %1503 = vmatpush1.bf16.msra.mxu0 %v1209
        %1504 = vmatprep.subr.bf16.mxu0 %v1215
        %1505 = vmatpush1.bf16.msra.mxu0 %v1214
        %1506 = vmatprep.subr.bf16.mxu0 %v1220
        %1507 = vmatpush1.bf16.msra.mxu0 %v1219
        %1508 = vmatprep.subr.bf16.mxu0 %v1225
        %1509 = vmatpush1.bf16.msra.mxu0 %v1224
        %1510 = vmatprep.subr.bf16.mxu0 %v1230
        %1511 = vmatpush1.bf16.msra.mxu0 %v1229
        %1512 = vmatprep.subr.bf16.mxu0 %v1235
        %1513 = vmatpush1.bf16.msra.mxu0 %v1234
        %1514 = vmatprep.subr.bf16.mxu0 %v1240
        %1515 = vmatpush1.bf16.msra.mxu0 %v1239
        %1516 = vmatprep.subr.bf16.mxu0 %v1245
        %1517 = vmatpush1.bf16.msra.mxu0 %v1244
        %1518 = vmatprep.subr.bf16.mxu0 %v1250
        %1519 = vmatpush1.bf16.msra.mxu0 %v1249
        %1520 = vmatprep.subr.bf16.mxu0 %v1255
        %1521 = vmatpush1.bf16.msra.mxu0 %v1254
        %1522 = vmatprep.subr.bf16.mxu0 %v1260
        %1523 = vmatpush1.bf16.msra.mxu0 %v1259
        %1524 = vmatprep.subr.bf16.mxu0 %v1265
        %1525 = vmatpush1.bf16.msra.mxu0 %v1264
        %1526 = vmatprep.subr.bf16.mxu0 %v1270
        %1527 = vmatpush1.bf16.msra.mxu0 %v1269
        %1528 = vmatprep.subr.bf16.mxu0 %v1275
        %1529 = vmatpush1.bf16.msra.mxu0 %v1274
        %1530 = vmatprep.subr.bf16.mxu0 %v1280
        %1531 = vmatpush1.bf16.msra.mxu0 %v1279
        %1532 = vmatprep.subr.bf16.mxu0 %v1285
        %1533 = vmatpush1.bf16.msra.mxu0 %v1284
        %1534 = vmatprep.mubr.bf16.mxu0 %v393
        %1535 = vmatmul.mubr.bf16.gmra.mrb[0].mxu0 %v392
        %v1536 = vpop.f32.mrb[0].mxu0
        %v1537 = vadd.f32 %v1484, %v1536
        %v1538 = vpop.f32.mrb[0].mxu0
        %v1539 = vadd.f32 %v1486, %v1538
        %v1540 = vpop.f32.mrb[0].mxu0
        %v1541 = vadd.f32 %v1488, %v1540
        %v1542 = vpop.f32.mrb[0].mxu0
        %v1543 = vadd.f32 %v1490, %v1542
        %1544 = vmatprep.mubr.bf16.mxu0 %v397
        %1545 = vmatmul.mubr.bf16.gmra.mrb[0].mxu0 %v396
        %v1546 = vpop.f32.mrb[0].mxu0
        %v1547 = vadd.f32 %v1494, %v1546
        %v1548 = vpop.f32.mrb[0].mxu0
        %v1549 = vadd.f32 %v1496, %v1548
        %v1550 = vpop.f32.mrb[0].mxu0
        %v1551 = vadd.f32 %v1498, %v1550
        %v1552 = vpop.f32.mrb[0].mxu0
        %v1553 = vadd.f32 %v1500, %v1552
        %1554 = vdwg.mxu0
        %1555 = vmatprep.subr.bf16.mxu0 %v1132
        %1556 = vmatpush1.bf16.msra.mxu0 %v1131
        %1557 = vmatprep.subr.bf16.mxu0 %v1137
        %1558 = vmatpush1.bf16.msra.mxu0 %v1136
        %1559 = vmatprep.subr.bf16.mxu0 %v1142
        %1560 = vmatpush1.bf16.msra.mxu0 %v1141
        %1561 = vmatprep.subr.bf16.mxu0 %v1147
        %1562 = vmatpush1.bf16.msra.mxu0 %v1146
        %1563 = vmatprep.subr.bf16.mxu0 %v1152
        %1564 = vmatpush1.bf16.msra.mxu0 %v1151
        %1565 = vmatprep.subr.bf16.mxu0 %v1157
        %1566 = vmatpush1.bf16.msra.mxu0 %v1156
        %1567 = vmatprep.subr.bf16.mxu0 %v1162
        %1568 = vmatpush1.bf16.msra.mxu0 %v1161
        %1569 = vmatprep.subr.bf16.mxu0 %v1167
        %1570 = vmatpush1.bf16.msra.mxu0 %v1166
        %1571 = vmatprep.subr.bf16.mxu0 %v1172
        %1572 = vmatpush1.bf16.msra.mxu0 %v1171
        %1573 = vmatprep.subr.bf16.mxu0 %v1177
        %1574 = vmatpush1.bf16.msra.mxu0 %v1176
        %1575 = vmatprep.subr.bf16.mxu0 %v1182
        %1576 = vmatpush1.bf16.msra.mxu0 %v1181
        %1577 = vmatprep.subr.bf16.mxu0 %v1187
        %1578 = vmatpush1.bf16.msra.mxu0 %v1186
        %1579 = vmatprep.subr.bf16.mxu0 %v1192
        %1580 = vmatpush1.bf16.msra.mxu0 %v1191
        %1581 = vmatprep.subr.bf16.mxu0 %v1197
        %1582 = vmatpush1.bf16.msra.mxu0 %v1196
        %1583 = vmatprep.subr.bf16.mxu0 %v1202
        %1584 = vmatpush1.bf16.msra.mxu0 %v1201
        %1585 = vmatprep.subr.bf16.mxu0 %v1207
        %1586 = vmatpush1.bf16.msra.mxu0 %v1206
        %1587 = vmatprep.mubr.bf16.mxu0 %v391
        %1588 = vmatmul.mubr.bf16.gmra.mrb[0].mxu0 %v390
        %v1589 = vpop.f32.mrb[0].mxu0
        %v1590 = vadd.f32 %v603, %v1589
        %v1591 = vpop.f32.mrb[0].mxu0
        %v1592 = vadd.f32 %v607, %v1591
        %v1593 = vpop.f32.mrb[0].mxu0
        %v1594 = vadd.f32 %v603, %v1593
        %v1595 = vpop.f32.mrb[0].mxu0
        %v1596 = vadd.f32 %v607, %v1595
        %1597 = vmatprep.mubr.bf16.mxu0 %v395
        %1598 = vmatmul.mubr.bf16.gmra.mrb[0].mxu0 %v394
        %v1599 = vpop.f32.mrb[0].mxu0
        %v1600 = vadd.f32 %v603, %v1599
        %v1601 = vpop.f32.mrb[0].mxu0
        %v1602 = vadd.f32 %v607, %v1601
        %v1603 = vpop.f32.mrb[0].mxu0
        %v1604 = vadd.f32 %v603, %v1603
        %v1605 = vpop.f32.mrb[0].mxu0
        %v1606 = vadd.f32 %v607, %v1605
        %1607 = vdwg.mxu0
        %1608 = vmatprep.subr.bf16.mxu0 %v1212
        %1609 = vmatpush1.bf16.msra.mxu0 %v1211
        %1610 = vmatprep.subr.bf16.mxu0 %v1217
        %1611 = vmatpush1.bf16.msra.mxu0 %v1216
        %1612 = vmatprep.subr.bf16.mxu0 %v1222
        %1613 = vmatpush1.bf16.msra.mxu0 %v1221
        %1614 = vmatprep.subr.bf16.mxu0 %v1227
        %1615 = vmatpush1.bf16.msra.mxu0 %v1226
        %1616 = vmatprep.subr.bf16.mxu0 %v1232
        %1617 = vmatpush1.bf16.msra.mxu0 %v1231
        %1618 = vmatprep.subr.bf16.mxu0 %v1237
        %1619 = vmatpush1.bf16.msra.mxu0 %v1236
        %1620 = vmatprep.subr.bf16.mxu0 %v1242
        %1621 = vmatpush1.bf16.msra.mxu0 %v1241
        %1622 = vmatprep.subr.bf16.mxu0 %v1247
        %1623 = vmatpush1.bf16.msra.mxu0 %v1246
        %1624 = vmatprep.subr.bf16.mxu0 %v1252
        %1625 = vmatpush1.bf16.msra.mxu0 %v1251
        %1626 = vmatprep.subr.bf16.mxu0 %v1257
        %1627 = vmatpush1.bf16.msra.mxu0 %v1256
        %1628 = vmatprep.subr.bf16.mxu0 %v1262
        %1629 = vmatpush1.bf16.msra.mxu0 %v1261
        %1630 = vmatprep.subr.bf16.mxu0 %v1267
        %1631 = vmatpush1.bf16.msra.mxu0 %v1266
        %1632 = vmatprep.subr.bf16.mxu0 %v1272
        %1633 = vmatpush1.bf16.msra.mxu0 %v1271
        %1634 = vmatprep.subr.bf16.mxu0 %v1277
        %1635 = vmatpush1.bf16.msra.mxu0 %v1276
        %1636 = vmatprep.subr.bf16.mxu0 %v1282
        %1637 = vmatpush1.bf16.msra.mxu0 %v1281
        %1638 = vmatprep.subr.bf16.mxu0 %v1287
        %1639 = vmatpush1.bf16.msra.mxu0 %v1286
        %1640 = vmatprep.mubr.bf16.mxu0 %v393
        %1641 = vmatmul.mubr.bf16.gmra.mrb[0].mxu0 %v392
        %v1642 = vpop.f32.mrb[0].mxu0
        %v1643 = vadd.f32 %v1590, %v1642
        %v1644 = vpop.f32.mrb[0].mxu0
        %v1645 = vadd.f32 %v1592, %v1644
        %v1646 = vpop.f32.mrb[0].mxu0
        %v1647 = vadd.f32 %v1594, %v1646
        %v1648 = vpop.f32.mrb[0].mxu0
        %v1649 = vadd.f32 %v1596, %v1648
        %1650 = vmatprep.mubr.bf16.mxu0 %v397
        %1651 = vmatmul.mubr.bf16.gmra.mrb[0].mxu0 %v396
        %v1652 = vpop.f32.mrb[0].mxu0
        %v1653 = vadd.f32 %v1600, %v1652
        %v1654 = vpop.f32.mrb[0].mxu0
        %v1655 = vadd.f32 %v1602, %v1654
        %v1656 = vpop.f32.mrb[0].mxu0
        %v1657 = vadd.f32 %v1604, %v1656
        %v1658 = vpop.f32.mrb[0].mxu0
        %v1659 = vadd.f32 %v1606, %v1658
        %1660 = vdwg.mxu0
        %1661 = vmatprep.subr.bf16.mxu0 0
        %1662 = vmatpush1.bf16.msra.mxu0 %v1133
        %1663 = vmatprep.subr.bf16.mxu0 0
        %1664 = vmatpush1.bf16.msra.mxu0 %v1138
        %1665 = vmatprep.subr.bf16.mxu0 0
        %1666 = vmatpush1.bf16.msra.mxu0 %v1143
        %1667 = vmatprep.subr.bf16.mxu0 0
        %1668 = vmatpush1.bf16.msra.mxu0 %v1148
        %1669 = vmatprep.subr.bf16.mxu0 0
        %1670 = vmatpush1.bf16.msra.mxu0 %v1153
        %1671 = vmatprep.subr.bf16.mxu0 0
        %1672 = vmatpush1.bf16.msra.mxu0 %v1158
        %1673 = vmatprep.subr.bf16.mxu0 0
        %1674 = vmatpush1.bf16.msra.mxu0 %v1163
        %1675 = vmatprep.subr.bf16.mxu0 0
        %1676 = vmatpush1.bf16.msra.mxu0 %v1168
        %1677 = vmatprep.subr.bf16.mxu0 0
        %1678 = vmatpush1.bf16.msra.mxu0 %v1173
        %1679 = vmatprep.subr.bf16.mxu0 0
        %1680 = vmatpush1.bf16.msra.mxu0 %v1178
        %1681 = vmatprep.subr.bf16.mxu0 0
        %1682 = vmatpush1.bf16.msra.mxu0 %v1183
        %1683 = vmatprep.subr.bf16.mxu0 0
        %1684 = vmatpush1.bf16.msra.mxu0 %v1188
        %1685 = vmatprep.subr.bf16.mxu0 0
        %1686 = vmatpush1.bf16.msra.mxu0 %v1193
        %1687 = vmatprep.subr.bf16.mxu0 0
        %1688 = vmatpush1.bf16.msra.mxu0 %v1198
        %1689 = vmatprep.subr.bf16.mxu0 0
        %1690 = vmatpush1.bf16.msra.mxu0 %v1203
        %1691 = vmatprep.subr.bf16.mxu0 0
        %1692 = vmatpush1.bf16.msra.mxu0 %v1208
        %1693 = vmatprep.mubr.bf16.mxu0 %v391
        %1694 = vmatmul.mubr.bf16.gmra.mrb[0].mxu0 %v390
        %v1695 = vpop.f32.mrb[0].mxu0
        %v1696 = vadd.f32 %v611, %v1695
        %v1697 = vpop.f32.mrb[0].mxu0
        %v1698 = vpop.f32.mrb[0].mxu0
        %v1699 = vadd.f32 %v611, %v1698
        %v1700 = vpop.f32.mrb[0].mxu0
        %1701 = vmatprep.mubr.bf16.mxu0 %v395
        %1702 = vmatmul.mubr.bf16.gmra.mrb[0].mxu0 %v394
        %v1703 = vpop.f32.mrb[0].mxu0
        %v1704 = vadd.f32 %v611, %v1703
        %v1705 = vpop.f32.mrb[0].mxu0
        %v1706 = vpop.f32.mrb[0].mxu0
        %v1707 = vadd.f32 %v611, %v1706
        %v1708 = vpop.f32.mrb[0].mxu0
        %1709 = vdwg.mxu0
        %1710 = vmatprep.subr.bf16.mxu0 0
        %1711 = vmatpush1.bf16.msra.mxu0 %v1213
        %1712 = vmatprep.subr.bf16.mxu0 0
        %1713 = vmatpush1.bf16.msra.mxu0 %v1218
        %1714 = vmatprep.subr.bf16.mxu0 0
        %1715 = vmatpush1.bf16.msra.mxu0 %v1223
        %1716 = vmatprep.subr.bf16.mxu0 0
        %1717 = vmatpush1.bf16.msra.mxu0 %v1228
        %1718 = vmatprep.subr.bf16.mxu0 0
        %1719 = vmatpush1.bf16.msra.mxu0 %v1233
        %1720 = vmatprep.subr.bf16.mxu0 0
        %1721 = vmatpush1.bf16.msra.mxu0 %v1238
        %1722 = vmatprep.subr.bf16.mxu0 0
        %1723 = vmatpush1.bf16.msra.mxu0 %v1243
        %1724 = vmatprep.subr.bf16.mxu0 0
        %1725 = vmatpush1.bf16.msra.mxu0 %v1248
        %1726 = vmatprep.subr.bf16.mxu0 0
        %1727 = vmatpush1.bf16.msra.mxu0 %v1253
        %1728 = vmatprep.subr.bf16.mxu0 0
        %1729 = vmatpush1.bf16.msra.mxu0 %v1258
        %1730 = vmatprep.subr.bf16.mxu0 0
        %1731 = vmatpush1.bf16.msra.mxu0 %v1263
        %1732 = vmatprep.subr.bf16.mxu0 0
        %1733 = vmatpush1.bf16.msra.mxu0 %v1268
        %1734 = vmatprep.subr.bf16.mxu0 0
        %1735 = vmatpush1.bf16.msra.mxu0 %v1273
        %1736 = vmatprep.subr.bf16.mxu0 0
        %1737 = vmatpush1.bf16.msra.mxu0 %v1278
        %1738 = vmatprep.subr.bf16.mxu0 0
        %1739 = vmatpush1.bf16.msra.mxu0 %v1283
        %1740 = vmatprep.subr.bf16.mxu0 0
        %1741 = vmatpush1.bf16.msra.mxu0 %v1288
        %1742 = vmatprep.mubr.bf16.mxu0 %v393
        %1743 = vmatmul.mubr.bf16.gmra.mrb[0].mxu0 %v392
        %v1744 = vpop.f32.mrb[0].mxu0
        %v1745 = vadd.f32 %v1696, %v1744
        %v1746 = vpop.f32.mrb[0].mxu0
        %v1747 = vpop.f32.mrb[0].mxu0
        %v1748 = vadd.f32 %v1699, %v1747
        %v1749 = vpop.f32.mrb[0].mxu0
        %1750 = vmatprep.mubr.bf16.mxu0 %v397
        %1751 = vmatmul.mubr.bf16.gmra.mrb[0].mxu0 %v396
        %v1752 = vpop.f32.mrb[0].mxu0
        %v1753 = vadd.f32 %v1704, %v1752
        %v1754 = vpop.f32.mrb[0].mxu0
        %v1755 = vpop.f32.mrb[0].mxu0
        %v1756 = vadd.f32 %v1707, %v1755
        %v1757 = vpop.f32.mrb[0].mxu0
        %1758 = vdwg.mxu0
        %1759 = vst [vmem:[#allocation2] sm:$0xff] %v1537
        %1760 = vst [vmem:[#allocation2 + $0x8] sm:$0xff] %v1539
        %1761 = vst [vmem:[#allocation2 + $0x10] sm:$0xff] %v1643
        %1762 = vst [vmem:[#allocation2 + $0x18] sm:$0xff] %v1645
        %1763 = vst [vmem:[#allocation2 + $0x20] sm:$0xff] %v1745
        %1764 = vst [vmem:[#allocation2 + $0x28] sm:$0xff] %v1541
        %1765 = vst [vmem:[#allocation2 + $0x30] sm:$0xff] %v1543
        %1766 = vst [vmem:[#allocation2 + $0x38] sm:$0xff] %v1647
        %1767 = vst [vmem:[#allocation2 + $0x40] sm:$0xff] %v1649
        %1768 = vst [vmem:[#allocation2 + $0x48] sm:$0xff] %v1748
        %1769 = vst [vmem:[#allocation2 + $0x50] sm:$0xff] %v1547
        %1770 = vst [vmem:[#allocation2 + $0x58] sm:$0xff] %v1549
        %1771 = vst [vmem:[#allocation2 + $0x60] sm:$0xff] %v1653
        %1772 = vst [vmem:[#allocation2 + $0x68] sm:$0xff] %v1655
        %1773 = vst [vmem:[#allocation2 + $0x70] sm:$0xff] %v1753
        %1774 = vst [vmem:[#allocation2 + $0x78] sm:$0xff] %v1551
        %1775 = vst [vmem:[#allocation2 + $0x80] sm:$0xff] %v1553
        %1776 = vst [vmem:[#allocation2 + $0x88] sm:$0xff] %v1657
        %1777 = vst [vmem:[#allocation2 + $0x90] sm:$0xff] %v1659
        %1778 = vst [vmem:[#allocation2 + $0x98] sm:$0xff] %v1756
        %v1779 = vld [vmem:[#allocation2] sm:$0xff]
        %v1780 = vld [vmem:[#allocation2 + $0x8] sm:$0xff]
        %v1781 = vld [vmem:[#allocation2 + $0x10] sm:$0xff]
        %v1782 = vld [vmem:[#allocation2 + $0x18] sm:$0xff]
        %v1783 = vld [vmem:[#allocation2 + $0x20] sm:$0xff]
        %v1784 = vld [vmem:[#allocation2 + $0x28] sm:$0xff]
        %v1785 = vld [vmem:[#allocation2 + $0x30] sm:$0xff]
        %v1786 = vld [vmem:[#allocation2 + $0x38] sm:$0xff]
        %v1787 = vld [vmem:[#allocation2 + $0x40] sm:$0xff]
        %v1788 = vld [vmem:[#allocation2 + $0x48] sm:$0xff]
        %v1789 = vld [vmem:[#allocation2 + $0x50] sm:$0xff]
        %v1790 = vld [vmem:[#allocation2 + $0x58] sm:$0xff]
        %v1791 = vld [vmem:[#allocation2 + $0x60] sm:$0xff]
        %v1792 = vld [vmem:[#allocation2 + $0x68] sm:$0xff]
        %v1793 = vld [vmem:[#allocation2 + $0x70] sm:$0xff]
        %v1794 = vld [vmem:[#allocation2 + $0x78] sm:$0xff]
        %v1795 = vld [vmem:[#allocation2 + $0x80] sm:$0xff]
        %v1796 = vld [vmem:[#allocation2 + $0x88] sm:$0xff]
        %v1797 = vld [vmem:[#allocation2 + $0x90] sm:$0xff]
        %v1798 = vld [vmem:[#allocation2 + $0x98] sm:$0xff]
        %v1799 = vld [vmem:[%s313] sm:$0xff]
        %v1800 = vld [vmem:[%s313 + $0x8] sm:$0xff]
        %v1801 = vld [vmem:[%s313 + $0x10] sm:$0xff]
        %v1802 = vld [vmem:[%s313 + $0x18] sm:$0xff]
        %v1803 = vld [vmem:[%s313 + $0x20] sm:$0xff]
        %v1804 = vld [vmem:[%s313 + $0x28] sm:$0xff]
        %v1805 = vld [vmem:[%s313 + $0x30] sm:$0xff]
        %v1806 = vld [vmem:[%s313 + $0x38] sm:$0xff]
        %v1807 = vld [vmem:[%s313 + $0x40] sm:$0xff]
        %v1808 = vld [vmem:[%s313 + $0x48] sm:$0xff]
        %v1809 = vld [vmem:[%s313 + $0x50] sm:$0xff]
        %v1810 = vld [vmem:[%s313 + $0x58] sm:$0xff]
        %v1811 = vld [vmem:[%s313 + $0x60] sm:$0xff]
        %v1812 = vld [vmem:[%s313 + $0x68] sm:$0xff]
        %v1813 = vld [vmem:[%s313 + $0x70] sm:$0xff]
        %v1814 = vld [vmem:[%s313 + $0x78] sm:$0xff]
        %v1815 = vld [vmem:[%s313 + $0x80] sm:$0xff]
        %v1816 = vld [vmem:[%s313 + $0x88] sm:$0xff]
        %v1817 = vld [vmem:[%s313 + $0x90] sm:$0xff]
        %v1818 = vld [vmem:[%s313 + $0x98] sm:$0xff]
        %v1819 = vmul.f32 %v1779, %v1799
        %v1820 = vmul.f32 %v1780, %v1800
        %v1821 = vmul.f32 %v1781, %v1801
        %v1822 = vmul.f32 %v1782, %v1802
        %v1823 = vmul.f32 %v1783, %v1803
        %v1824 = vmul.f32 %v1784, %v1804
        %v1825 = vmul.f32 %v1785, %v1805
        %v1826 = vmul.f32 %v1786, %v1806
        %v1827 = vmul.f32 %v1787, %v1807
        %v1828 = vmul.f32 %v1788, %v1808
        %v1829 = vmul.f32 %v1789, %v1809
        %v1830 = vmul.f32 %v1790, %v1810
        %v1831 = vmul.f32 %v1791, %v1811
        %v1832 = vmul.f32 %v1792, %v1812
        %v1833 = vmul.f32 %v1793, %v1813
        %v1834 = vmul.f32 %v1794, %v1814
        %v1835 = vmul.f32 %v1795, %v1815
        %v1836 = vmul.f32 %v1796, %v1816
        %v1837 = vmul.f32 %v1797, %v1817
        %v1838 = vmul.f32 %v1798, %v1818
        %1839 = vst [vmem:[#allocation2] sm:$0xff] %v1819
        %1840 = vst [vmem:[#allocation2 + $0x8] sm:$0xff] %v1820
        %1841 = vst [vmem:[#allocation2 + $0x10] sm:$0xff] %v1821
        %1842 = vst [vmem:[#allocation2 + $0x18] sm:$0xff] %v1822
        %vm1843 = vcmask 752640
        %1844 = vst.msk [vmem:[#allocation2 + $0x20] sm:$0xff] %vm1843, %v1823
        %1845 = vst [vmem:[#allocation2 + $0x28] sm:$0xff] %v1824
        %1846 = vst [vmem:[#allocation2 + $0x30] sm:$0xff] %v1825
        %1847 = vst [vmem:[#allocation2 + $0x38] sm:$0xff] %v1826
        %1848 = vst [vmem:[#allocation2 + $0x40] sm:$0xff] %v1827
        %1849 = vst.msk [vmem:[#allocation2 + $0x48] sm:$0xff] %vm1843, %v1828
        %1850 = vst [vmem:[#allocation2 + $0x50] sm:$0xff] %v1829
        %1851 = vst [vmem:[#allocation2 + $0x58] sm:$0xff] %v1830
        %1852 = vst [vmem:[#allocation2 + $0x60] sm:$0xff] %v1831
        %1853 = vst [vmem:[#allocation2 + $0x68] sm:$0xff] %v1832
        %1854 = vst.msk [vmem:[#allocation2 + $0x70] sm:$0xff] %vm1843, %v1833
        %1855 = vst [vmem:[#allocation2 + $0x78] sm:$0xff] %v1834
        %1856 = vst [vmem:[#allocation2 + $0x80] sm:$0xff] %v1835
        %1857 = vst [vmem:[#allocation2 + $0x88] sm:$0xff] %v1836
        %1858 = vst [vmem:[#allocation2 + $0x90] sm:$0xff] %v1837
        %1859 = vst.msk [vmem:[#allocation2 + $0x98] sm:$0xff] %vm1843, %v1838
        %v1860 = vld [vmem:[#allocation2] sm:$0xff]
        %v1861 = vld [vmem:[#allocation2 + $0x8] sm:$0xff]
        %v1862 = vld [vmem:[#allocation2 + $0x10] sm:$0xff]
        %v1863 = vld [vmem:[#allocation2 + $0x18] sm:$0xff]
        %v1864 = vld [vmem:[#allocation2 + $0x20] sm:$0xff]
        %v1865 = vld [vmem:[#allocation2 + $0x28] sm:$0xff]
        %v1866 = vld [vmem:[#allocation2 + $0x30] sm:$0xff]
        %v1867 = vld [vmem:[#allocation2 + $0x38] sm:$0xff]
        %v1868 = vld [vmem:[#allocation2 + $0x40] sm:$0xff]
        %v1869 = vld [vmem:[#allocation2 + $0x48] sm:$0xff]
        %v1870 = vld [vmem:[#allocation2 + $0x50] sm:$0xff]
        %v1871 = vld [vmem:[#allocation2 + $0x58] sm:$0xff]
        %v1872 = vld [vmem:[#allocation2 + $0x60] sm:$0xff]
        %v1873 = vld [vmem:[#allocation2 + $0x68] sm:$0xff]
        %v1874 = vld [vmem:[#allocation2 + $0x70] sm:$0xff]
        %v1875 = vld [vmem:[#allocation2 + $0x78] sm:$0xff]
        %v1876 = vld [vmem:[#allocation2 + $0x80] sm:$0xff]
        %v1877 = vld [vmem:[#allocation2 + $0x88] sm:$0xff]
        %v1878 = vld [vmem:[#allocation2 + $0x90] sm:$0xff]
        %v1879 = vld [vmem:[#allocation2 + $0x98] sm:$0xff]
        %v1880 = vpack.c.bf16 %v1865, %v1860
        %v1881 = vpack.c.bf16 %v1866, %v1861
        %v1882 = vpack.c.bf16 %v1867, %v1862
        %v1883 = vpack.c.bf16 %v1868, %v1863
        %v1884 = vpack.c.bf16 %v1869, %v1864
        %v1885 = vpack.c.bf16 %v1875, %v1870
        %v1886 = vpack.c.bf16 %v1876, %v1871
        %v1887 = vpack.c.bf16 %v1877, %v1872
        %v1888 = vpack.c.bf16 %v1878, %v1873
        %v1889 = vpack.c.bf16 %v1879, %v1874
        %v1890 = vld [vmem:[#allocation9] sm:$0xff]
        %v1891 = vld [vmem:[#allocation9 + $0x8] sm:$0xff]
        %v1892 = vld [vmem:[#allocation9 + $0x10] sm:$0xff]
        %v1893 = vld [vmem:[#allocation9 + $0x18] sm:$0xff]
        %v1894 = vld [vmem:[#allocation9 + $0x20] sm:$0xff]
        %v1895 = vld [vmem:[#allocation9 + $0x28] sm:$0xff]
        %v1896 = vld [vmem:[#allocation9 + $0x30] sm:$0xff]
        %v1897 = vld [vmem:[#allocation9 + $0x38] sm:$0xff]
        %v1898 = vld [vmem:[#allocation9 + $0x40] sm:$0xff]
        %v1899 = vld [vmem:[#allocation9 + $0x48] sm:$0xff]
        %v1900 = vld [vmem:[#allocation9 + $0x50] sm:$0xff]
        %v1901 = vld [vmem:[#allocation9 + $0x58] sm:$0xff]
        %v1902 = vld [vmem:[#allocation9 + $0x60] sm:$0xff]
        %v1903 = vld [vmem:[#allocation9 + $0x68] sm:$0xff]
        %v1904 = vld [vmem:[#allocation9 + $0x70] sm:$0xff]
        %v1905 = vld [vmem:[#allocation9 + $0x78] sm:$0xff]
        %v1906 = vld [vmem:[#allocation9 + $0x80] sm:$0xff]
        %v1907 = vld [vmem:[#allocation9 + $0x88] sm:$0xff]
        %v1908 = vld [vmem:[#allocation9 + $0x90] sm:$0xff]
        %v1909 = vld [vmem:[#allocation9 + $0x98] sm:$0xff]
        %v1910 = vld [vmem:[#allocation9 + $0xa0] sm:$0xff]
        %v1911 = vld [vmem:[#allocation9 + $0xa8] sm:$0xff]
        %v1912 = vld [vmem:[#allocation9 + $0xb0] sm:$0xff]
        %v1913 = vld [vmem:[#allocation9 + $0xb8] sm:$0xff]
        %v1914 = vld [vmem:[#allocation9 + $0xc0] sm:$0xff]
        %v1915 = vld [vmem:[#allocation9 + $0xc8] sm:$0xff]
        %v1916 = vld [vmem:[#allocation9 + $0xd0] sm:$0xff]
        %v1917 = vld [vmem:[#allocation9 + $0xd8] sm:$0xff]
        %v1918 = vld [vmem:[#allocation9 + $0xe0] sm:$0xff]
        %v1919 = vld [vmem:[#allocation9 + $0xe8] sm:$0xff]
        %v1920 = vld [vmem:[#allocation9 + $0xf0] sm:$0xff]
        %v1921 = vld [vmem:[#allocation9 + $0xf8] sm:$0xff]
        %v1922 = vld [vmem:[#allocation9 + $0x100] sm:$0xff]
        %v1923 = vld [vmem:[#allocation9 + $0x108] sm:$0xff]
        %v1924 = vld [vmem:[#allocation9 + $0x110] sm:$0xff]
        %v1925 = vld [vmem:[#allocation9 + $0x118] sm:$0xff]
        %v1926 = vld [vmem:[#allocation9 + $0x120] sm:$0xff]
        %v1927 = vld [vmem:[#allocation9 + $0x128] sm:$0xff]
        %v1928 = vld [vmem:[#allocation9 + $0x130] sm:$0xff]
        %v1929 = vld [vmem:[#allocation9 + $0x138] sm:$0xff]
        %v1930 = vld [vmem:[#allocation9 + $0x140] sm:$0xff]
        %v1931 = vld [vmem:[#allocation9 + $0x148] sm:$0xff]
        %v1932 = vld [vmem:[#allocation9 + $0x150] sm:$0xff]
        %v1933 = vld [vmem:[#allocation9 + $0x158] sm:$0xff]
        %v1934 = vld [vmem:[#allocation9 + $0x160] sm:$0xff]
        %v1935 = vld [vmem:[#allocation9 + $0x168] sm:$0xff]
        %v1936 = vld [vmem:[#allocation9 + $0x170] sm:$0xff]
        %v1937 = vld [vmem:[#allocation9 + $0x178] sm:$0xff]
        %v1938 = vld [vmem:[#allocation9 + $0x180] sm:$0xff]
        %v1939 = vld [vmem:[#allocation9 + $0x188] sm:$0xff]
        %v1940 = vld [vmem:[#allocation9 + $0x190] sm:$0xff]
        %v1941 = vld [vmem:[#allocation9 + $0x198] sm:$0xff]
        %v1942 = vld [vmem:[#allocation9 + $0x1a0] sm:$0xff]
        %v1943 = vld [vmem:[#allocation9 + $0x1a8] sm:$0xff]
        %v1944 = vld [vmem:[#allocation9 + $0x1b0] sm:$0xff]
        %v1945 = vld [vmem:[#allocation9 + $0x1b8] sm:$0xff]
        %v1946 = vld [vmem:[#allocation9 + $0x1c0] sm:$0xff]
        %v1947 = vld [vmem:[#allocation9 + $0x1c8] sm:$0xff]
        %v1948 = vld [vmem:[#allocation9 + $0x1d0] sm:$0xff]
        %v1949 = vld [vmem:[#allocation9 + $0x1d8] sm:$0xff]
        %v1950 = vld [vmem:[#allocation9 + $0x1e0] sm:$0xff]
        %v1951 = vld [vmem:[#allocation9 + $0x1e8] sm:$0xff]
        %v1952 = vld [vmem:[#allocation9 + $0x1f0] sm:$0xff]
        %v1953 = vld [vmem:[#allocation9 + $0x1f8] sm:$0xff]
        %v1954 = vld [vmem:[#allocation9 + $0x200] sm:$0xff]
        %v1955 = vld [vmem:[#allocation9 + $0x208] sm:$0xff]
        %v1956 = vld [vmem:[#allocation9 + $0x210] sm:$0xff]
        %v1957 = vld [vmem:[#allocation9 + $0x218] sm:$0xff]
        %v1958 = vld [vmem:[#allocation9 + $0x220] sm:$0xff]
        %v1959 = vld [vmem:[#allocation9 + $0x228] sm:$0xff]
        %v1960 = vld [vmem:[#allocation9 + $0x230] sm:$0xff]
        %v1961 = vld [vmem:[#allocation9 + $0x238] sm:$0xff]
        %v1962 = vld [vmem:[#allocation9 + $0x240] sm:$0xff]
        %v1963 = vld [vmem:[#allocation9 + $0x248] sm:$0xff]
        %v1964 = vld [vmem:[#allocation9 + $0x250] sm:$0xff]
        %v1965 = vld [vmem:[#allocation9 + $0x258] sm:$0xff]
        %v1966 = vld [vmem:[#allocation9 + $0x260] sm:$0xff]
        %v1967 = vld [vmem:[#allocation9 + $0x268] sm:$0xff]
        %v1968 = vld [vmem:[#allocation9 + $0x270] sm:$0xff]
        %v1969 = vld [vmem:[#allocation9 + $0x278] sm:$0xff]
        %v1970 = vld [vmem:[#allocation9 + $0x280] sm:$0xff]
        %v1971 = vld [vmem:[#allocation9 + $0x288] sm:$0xff]
        %v1972 = vld [vmem:[#allocation9 + $0x290] sm:$0xff]
        %v1973 = vld [vmem:[#allocation9 + $0x298] sm:$0xff]
        %v1974 = vld [vmem:[#allocation9 + $0x2a0] sm:$0xff]
        %v1975 = vld [vmem:[#allocation9 + $0x2a8] sm:$0xff]
        %v1976 = vld [vmem:[#allocation9 + $0x2b0] sm:$0xff]
        %v1977 = vld [vmem:[#allocation9 + $0x2b8] sm:$0xff]
        %v1978 = vld [vmem:[#allocation9 + $0x2c0] sm:$0xff]
        %v1979 = vld [vmem:[#allocation9 + $0x2c8] sm:$0xff]
        %v1980 = vld [vmem:[#allocation9 + $0x2d0] sm:$0xff]
        %v1981 = vld [vmem:[#allocation9 + $0x2d8] sm:$0xff]
        %v1982 = vld [vmem:[#allocation9 + $0x2e0] sm:$0xff]
        %v1983 = vld [vmem:[#allocation9 + $0x2e8] sm:$0xff]
        %v1984 = vld [vmem:[#allocation9 + $0x2f0] sm:$0xff]
        %v1985 = vld [vmem:[#allocation9 + $0x2f8] sm:$0xff]
        %v1986 = vld [vmem:[#allocation9 + $0x300] sm:$0xff]
        %v1987 = vld [vmem:[#allocation9 + $0x308] sm:$0xff]
        %v1988 = vld [vmem:[#allocation9 + $0x310] sm:$0xff]
        %v1989 = vld [vmem:[#allocation9 + $0x318] sm:$0xff]
        %v1990 = vld [vmem:[#allocation9 + $0x320] sm:$0xff]
        %v1991 = vld [vmem:[#allocation9 + $0x328] sm:$0xff]
        %v1992 = vld [vmem:[#allocation9 + $0x330] sm:$0xff]
        %v1993 = vld [vmem:[#allocation9 + $0x338] sm:$0xff]
        %v1994 = vld [vmem:[#allocation9 + $0x340] sm:$0xff]
        %v1995 = vld [vmem:[#allocation9 + $0x348] sm:$0xff]
        %v1996 = vld [vmem:[#allocation9 + $0x350] sm:$0xff]
        %v1997 = vld [vmem:[#allocation9 + $0x358] sm:$0xff]
        %v1998 = vld [vmem:[#allocation9 + $0x360] sm:$0xff]
        %v1999 = vld [vmem:[#allocation9 + $0x368] sm:$0xff]
        %v2000 = vld [vmem:[#allocation9 + $0x370] sm:$0xff]
        %v2001 = vld [vmem:[#allocation9 + $0x378] sm:$0xff]
        %v2002 = vld [vmem:[#allocation9 + $0x380] sm:$0xff]
        %v2003 = vld [vmem:[#allocation9 + $0x388] sm:$0xff]
        %v2004 = vld [vmem:[#allocation9 + $0x390] sm:$0xff]
        %v2005 = vld [vmem:[#allocation9 + $0x398] sm:$0xff]
        %v2006 = vld [vmem:[#allocation9 + $0x3a0] sm:$0xff]
        %v2007 = vld [vmem:[#allocation9 + $0x3a8] sm:$0xff]
        %v2008 = vld [vmem:[#allocation9 + $0x3b0] sm:$0xff]
        %v2009 = vld [vmem:[#allocation9 + $0x3b8] sm:$0xff]
        %v2010 = vld [vmem:[#allocation9 + $0x3c0] sm:$0xff]
        %v2011 = vld [vmem:[#allocation9 + $0x3c8] sm:$0xff]
        %v2012 = vld [vmem:[#allocation9 + $0x3d0] sm:$0xff]
        %v2013 = vld [vmem:[#allocation9 + $0x3d8] sm:$0xff]
        %v2014 = vld [vmem:[#allocation9 + $0x3e0] sm:$0xff]
        %v2015 = vld [vmem:[#allocation9 + $0x3e8] sm:$0xff]
        %v2016 = vld [vmem:[#allocation9 + $0x3f0] sm:$0xff]
        %v2017 = vld [vmem:[#allocation9 + $0x3f8] sm:$0xff]
        %v2018 = vld [vmem:[#allocation9 + $0x400] sm:$0xff]
        %v2019 = vld [vmem:[#allocation9 + $0x408] sm:$0xff]
        %v2020 = vld [vmem:[#allocation9 + $0x410] sm:$0xff]
        %v2021 = vld [vmem:[#allocation9 + $0x418] sm:$0xff]
        %v2022 = vld [vmem:[#allocation9 + $0x420] sm:$0xff]
        %v2023 = vld [vmem:[#allocation9 + $0x428] sm:$0xff]
        %v2024 = vld [vmem:[#allocation9 + $0x430] sm:$0xff]
        %v2025 = vld [vmem:[#allocation9 + $0x438] sm:$0xff]
        %v2026 = vld [vmem:[#allocation9 + $0x440] sm:$0xff]
        %v2027 = vld [vmem:[#allocation9 + $0x448] sm:$0xff]
        %v2028 = vld [vmem:[#allocation9 + $0x450] sm:$0xff]
        %v2029 = vld [vmem:[#allocation9 + $0x458] sm:$0xff]
        %v2030 = vld [vmem:[#allocation9 + $0x460] sm:$0xff]
        %v2031 = vld [vmem:[#allocation9 + $0x468] sm:$0xff]
        %v2032 = vld [vmem:[#allocation9 + $0x470] sm:$0xff]
        %v2033 = vld [vmem:[#allocation9 + $0x478] sm:$0xff]
        %v2034 = vld [vmem:[#allocation9 + $0x480] sm:$0xff]
        %v2035 = vld [vmem:[#allocation9 + $0x488] sm:$0xff]
        %v2036 = vld [vmem:[#allocation9 + $0x490] sm:$0xff]
        %v2037 = vld [vmem:[#allocation9 + $0x498] sm:$0xff]
        %v2038 = vld [vmem:[#allocation9 + $0x4a0] sm:$0xff]
        %v2039 = vld [vmem:[#allocation9 + $0x4a8] sm:$0xff]
        %v2040 = vld [vmem:[#allocation9 + $0x4b0] sm:$0xff]
        %v2041 = vld [vmem:[#allocation9 + $0x4b8] sm:$0xff]
        %v2042 = vld [vmem:[#allocation9 + $0x4c0] sm:$0xff]
        %v2043 = vld [vmem:[#allocation9 + $0x4c8] sm:$0xff]
        %v2044 = vld [vmem:[#allocation9 + $0x4d0] sm:$0xff]
        %v2045 = vld [vmem:[#allocation9 + $0x4d8] sm:$0xff]
        %v2046 = vld [vmem:[#allocation9 + $0x4e0] sm:$0xff]
        %v2047 = vld [vmem:[#allocation9 + $0x4e8] sm:$0xff]
        %v2048 = vld [vmem:[#allocation9 + $0x4f0] sm:$0xff]
        %v2049 = vld [vmem:[#allocation9 + $0x4f8] sm:$0xff]
        %v2050 = vld [vmem:[%s5] sm:$0xf]
        %v2052 = vlaneseq
        %v2053 = vshrl.u32 %v2052, 7
        %v2054 = vsub.s32 0, %v2053
        %v2055 = vrot.slane %v2050, %v2054
        %v2056 = vlaneseq
        %v2057 = vshrl.u32 %v2056, 7
        %v2058 = vsub.s32 1, %v2057
        %v2059 = vrot.slane %v2050, %v2058
        %v2060 = vlaneseq
        %v2061 = vshrl.u32 %v2060, 7
        %v2062 = vsub.s32 2, %v2061
        %v2063 = vrot.slane %v2050, %v2062
        %v2064 = vlaneseq
        %v2065 = vshrl.u32 %v2064, 7
        %v2066 = vsub.s32 3, %v2065
        %v2067 = vrot.slane %v2050, %v2066
        %v2232 = vunpack.c.l.b16 %v1890
        %v2233 = vunpack.c.h.b16 %v1890
        %v2234 = vunpack.c.l.b16 %v1891
        %v2235 = vunpack.c.h.b16 %v1891
        %v2236 = vunpack.c.l.b16 %v1892
        %v2237 = vunpack.c.h.b16 %v1892
        %v2238 = vunpack.c.l.b16 %v1893
        %v2239 = vunpack.c.h.b16 %v1893
        %v2240 = vunpack.c.l.b16 %v1894
        %v2241 = vunpack.c.h.b16 %v1894
        %v2242 = vunpack.c.l.b16 %v1895
        %v2243 = vunpack.c.h.b16 %v1895
        %v2244 = vunpack.c.l.b16 %v1896
        %v2245 = vunpack.c.h.b16 %v1896
        %v2246 = vunpack.c.l.b16 %v1897
        %v2247 = vunpack.c.h.b16 %v1897
        %v2248 = vunpack.c.l.b16 %v1898
        %v2249 = vunpack.c.h.b16 %v1898
        %v2250 = vunpack.c.l.b16 %v1899
        %v2251 = vunpack.c.h.b16 %v1899
        %v2252 = vunpack.c.l.b16 %v1900
        %v2253 = vunpack.c.h.b16 %v1900
        %v2254 = vunpack.c.l.b16 %v1901
        %v2255 = vunpack.c.h.b16 %v1901
        %v2256 = vunpack.c.l.b16 %v1902
        %v2257 = vunpack.c.h.b16 %v1902
        %v2258 = vunpack.c.l.b16 %v1903
        %v2259 = vunpack.c.h.b16 %v1903
        %v2260 = vunpack.c.l.b16 %v1904
        %v2261 = vunpack.c.h.b16 %v1904
        %v2262 = vunpack.c.l.b16 %v1905
        %v2263 = vunpack.c.h.b16 %v1905
        %v2264 = vunpack.c.l.b16 %v1906
        %v2265 = vunpack.c.h.b16 %v1906
        %v2266 = vunpack.c.l.b16 %v1907
        %v2267 = vunpack.c.h.b16 %v1907
        %v2268 = vunpack.c.l.b16 %v1908
        %v2269 = vunpack.c.h.b16 %v1908
        %v2270 = vunpack.c.l.b16 %v1909
        %v2271 = vunpack.c.h.b16 %v1909
        %v2272 = vunpack.c.l.b16 %v1910
        %v2273 = vunpack.c.h.b16 %v1910
        %v2274 = vunpack.c.l.b16 %v1911
        %v2275 = vunpack.c.h.b16 %v1911
        %v2276 = vunpack.c.l.b16 %v1912
        %v2277 = vunpack.c.h.b16 %v1912
        %v2278 = vunpack.c.l.b16 %v1913
        %v2279 = vunpack.c.h.b16 %v1913
        %v2280 = vunpack.c.l.b16 %v1914
        %v2281 = vunpack.c.h.b16 %v1914
        %v2282 = vunpack.c.l.b16 %v1915
        %v2283 = vunpack.c.h.b16 %v1915
        %v2284 = vunpack.c.l.b16 %v1916
        %v2285 = vunpack.c.h.b16 %v1916
        %v2286 = vunpack.c.l.b16 %v1917
        %v2287 = vunpack.c.h.b16 %v1917
        %v2288 = vunpack.c.l.b16 %v1918
        %v2289 = vunpack.c.h.b16 %v1918
        %v2290 = vunpack.c.l.b16 %v1919
        %v2291 = vunpack.c.h.b16 %v1919
        %v2292 = vunpack.c.l.b16 %v1920
        %v2293 = vunpack.c.h.b16 %v1920
        %v2294 = vunpack.c.l.b16 %v1921
        %v2295 = vunpack.c.h.b16 %v1921
        %v2296 = vunpack.c.l.b16 %v1922
        %v2297 = vunpack.c.h.b16 %v1922
        %v2298 = vunpack.c.l.b16 %v1923
        %v2299 = vunpack.c.h.b16 %v1923
        %v2300 = vunpack.c.l.b16 %v1924
        %v2301 = vunpack.c.h.b16 %v1924
        %v2302 = vunpack.c.l.b16 %v1925
        %v2303 = vunpack.c.h.b16 %v1925
        %v2304 = vunpack.c.l.b16 %v1926
        %v2305 = vunpack.c.h.b16 %v1926
        %v2306 = vunpack.c.l.b16 %v1927
        %v2307 = vunpack.c.h.b16 %v1927
        %v2308 = vunpack.c.l.b16 %v1928
        %v2309 = vunpack.c.h.b16 %v1928
        %v2310 = vunpack.c.l.b16 %v1929
        %v2311 = vunpack.c.h.b16 %v1929
        %v2312 = vunpack.c.l.b16 %v1930
        %v2313 = vunpack.c.h.b16 %v1930
        %v2314 = vunpack.c.l.b16 %v1931
        %v2315 = vunpack.c.h.b16 %v1931
        %v2316 = vunpack.c.l.b16 %v1932
        %v2317 = vunpack.c.h.b16 %v1932
        %v2318 = vunpack.c.l.b16 %v1933
        %v2319 = vunpack.c.h.b16 %v1933
        %v2320 = vunpack.c.l.b16 %v1934
        %v2321 = vunpack.c.h.b16 %v1934
        %v2322 = vunpack.c.l.b16 %v1935
        %v2323 = vunpack.c.h.b16 %v1935
        %v2324 = vunpack.c.l.b16 %v1936
        %v2325 = vunpack.c.h.b16 %v1936
        %v2326 = vunpack.c.l.b16 %v1937
        %v2327 = vunpack.c.h.b16 %v1937
        %v2328 = vunpack.c.l.b16 %v1938
        %v2329 = vunpack.c.h.b16 %v1938
        %v2330 = vunpack.c.l.b16 %v1939
        %v2331 = vunpack.c.h.b16 %v1939
        %v2332 = vunpack.c.l.b16 %v1940
        %v2333 = vunpack.c.h.b16 %v1940
        %v2334 = vunpack.c.l.b16 %v1941
        %v2335 = vunpack.c.h.b16 %v1941
        %v2336 = vunpack.c.l.b16 %v1942
        %v2337 = vunpack.c.h.b16 %v1942
        %v2338 = vunpack.c.l.b16 %v1943
        %v2339 = vunpack.c.h.b16 %v1943
        %v2340 = vunpack.c.l.b16 %v1944
        %v2341 = vunpack.c.h.b16 %v1944
        %v2342 = vunpack.c.l.b16 %v1945
        %v2343 = vunpack.c.h.b16 %v1945
        %v2344 = vunpack.c.l.b16 %v1946
        %v2345 = vunpack.c.h.b16 %v1946
        %v2346 = vunpack.c.l.b16 %v1947
        %v2347 = vunpack.c.h.b16 %v1947
        %v2348 = vunpack.c.l.b16 %v1948
        %v2349 = vunpack.c.h.b16 %v1948
        %v2350 = vunpack.c.l.b16 %v1949
        %v2351 = vunpack.c.h.b16 %v1949
        %v2352 = vunpack.c.l.b16 %v1950
        %v2353 = vunpack.c.h.b16 %v1950
        %v2354 = vunpack.c.l.b16 %v1951
        %v2355 = vunpack.c.h.b16 %v1951
        %v2356 = vunpack.c.l.b16 %v1952
        %v2357 = vunpack.c.h.b16 %v1952
        %v2358 = vunpack.c.l.b16 %v1953
        %v2359 = vunpack.c.h.b16 %v1953
        %v2360 = vunpack.c.l.b16 %v1954
        %v2361 = vunpack.c.h.b16 %v1954
        %v2362 = vunpack.c.l.b16 %v1955
        %v2363 = vunpack.c.h.b16 %v1955
        %v2364 = vunpack.c.l.b16 %v1956
        %v2365 = vunpack.c.h.b16 %v1956
        %v2366 = vunpack.c.l.b16 %v1957
        %v2367 = vunpack.c.h.b16 %v1957
        %v2368 = vunpack.c.l.b16 %v1958
        %v2369 = vunpack.c.h.b16 %v1958
        %v2370 = vunpack.c.l.b16 %v1959
        %v2371 = vunpack.c.h.b16 %v1959
        %v2372 = vunpack.c.l.b16 %v1960
        %v2373 = vunpack.c.h.b16 %v1960
        %v2374 = vunpack.c.l.b16 %v1961
        %v2375 = vunpack.c.h.b16 %v1961
        %v2376 = vunpack.c.l.b16 %v1962
        %v2377 = vunpack.c.h.b16 %v1962
        %v2378 = vunpack.c.l.b16 %v1963
        %v2379 = vunpack.c.h.b16 %v1963
        %v2380 = vunpack.c.l.b16 %v1964
        %v2381 = vunpack.c.h.b16 %v1964
        %v2382 = vunpack.c.l.b16 %v1965
        %v2383 = vunpack.c.h.b16 %v1965
        %v2384 = vunpack.c.l.b16 %v1966
        %v2385 = vunpack.c.h.b16 %v1966
        %v2386 = vunpack.c.l.b16 %v1967
        %v2387 = vunpack.c.h.b16 %v1967
        %v2388 = vunpack.c.l.b16 %v1968
        %v2389 = vunpack.c.h.b16 %v1968
        %v2390 = vunpack.c.l.b16 %v1969
        %v2391 = vunpack.c.h.b16 %v1969
        %v2392 = vunpack.c.l.b16 %v1970
        %v2393 = vunpack.c.h.b16 %v1970
        %v2394 = vunpack.c.l.b16 %v1971
        %v2395 = vunpack.c.h.b16 %v1971
        %v2396 = vunpack.c.l.b16 %v1972
        %v2397 = vunpack.c.h.b16 %v1972
        %v2398 = vunpack.c.l.b16 %v1973
        %v2399 = vunpack.c.h.b16 %v1973
        %v2400 = vunpack.c.l.b16 %v1974
        %v2401 = vunpack.c.h.b16 %v1974
        %v2402 = vunpack.c.l.b16 %v1975
        %v2403 = vunpack.c.h.b16 %v1975
        %v2404 = vunpack.c.l.b16 %v1976
        %v2405 = vunpack.c.h.b16 %v1976
        %v2406 = vunpack.c.l.b16 %v1977
        %v2407 = vunpack.c.h.b16 %v1977
        %v2408 = vunpack.c.l.b16 %v1978
        %v2409 = vunpack.c.h.b16 %v1978
        %v2410 = vunpack.c.l.b16 %v1979
        %v2411 = vunpack.c.h.b16 %v1979
        %v2412 = vunpack.c.l.b16 %v1980
        %v2413 = vunpack.c.h.b16 %v1980
        %v2414 = vunpack.c.l.b16 %v1981
        %v2415 = vunpack.c.h.b16 %v1981
        %v2416 = vunpack.c.l.b16 %v1982
        %v2417 = vunpack.c.h.b16 %v1982
        %v2418 = vunpack.c.l.b16 %v1983
        %v2419 = vunpack.c.h.b16 %v1983
        %v2420 = vunpack.c.l.b16 %v1984
        %v2421 = vunpack.c.h.b16 %v1984
        %v2422 = vunpack.c.l.b16 %v1985
        %v2423 = vunpack.c.h.b16 %v1985
        %v2424 = vunpack.c.l.b16 %v1986
        %v2425 = vunpack.c.h.b16 %v1986
        %v2426 = vunpack.c.l.b16 %v1987
        %v2427 = vunpack.c.h.b16 %v1987
        %v2428 = vunpack.c.l.b16 %v1988
        %v2429 = vunpack.c.h.b16 %v1988
        %v2430 = vunpack.c.l.b16 %v1989
        %v2431 = vunpack.c.h.b16 %v1989
        %v2432 = vunpack.c.l.b16 %v1990
        %v2433 = vunpack.c.h.b16 %v1990
        %v2434 = vunpack.c.l.b16 %v1991
        %v2435 = vunpack.c.h.b16 %v1991
        %v2436 = vunpack.c.l.b16 %v1992
        %v2437 = vunpack.c.h.b16 %v1992
        %v2438 = vunpack.c.l.b16 %v1993
        %v2439 = vunpack.c.h.b16 %v1993
        %v2440 = vunpack.c.l.b16 %v1994
        %v2441 = vunpack.c.h.b16 %v1994
        %v2442 = vunpack.c.l.b16 %v1995
        %v2443 = vunpack.c.h.b16 %v1995
        %v2444 = vunpack.c.l.b16 %v1996
        %v2445 = vunpack.c.h.b16 %v1996
        %v2446 = vunpack.c.l.b16 %v1997
        %v2447 = vunpack.c.h.b16 %v1997
        %v2448 = vunpack.c.l.b16 %v1998
        %v2449 = vunpack.c.h.b16 %v1998
        %v2450 = vunpack.c.l.b16 %v1999
        %v2451 = vunpack.c.h.b16 %v1999
        %v2452 = vunpack.c.l.b16 %v2000
        %v2453 = vunpack.c.h.b16 %v2000
        %v2454 = vunpack.c.l.b16 %v2001
        %v2455 = vunpack.c.h.b16 %v2001
        %v2456 = vunpack.c.l.b16 %v2002
        %v2457 = vunpack.c.h.b16 %v2002
        %v2458 = vunpack.c.l.b16 %v2003
        %v2459 = vunpack.c.h.b16 %v2003
        %v2460 = vunpack.c.l.b16 %v2004
        %v2461 = vunpack.c.h.b16 %v2004
        %v2462 = vunpack.c.l.b16 %v2005
        %v2463 = vunpack.c.h.b16 %v2005
        %v2464 = vunpack.c.l.b16 %v2006
        %v2465 = vunpack.c.h.b16 %v2006
        %v2466 = vunpack.c.l.b16 %v2007
        %v2467 = vunpack.c.h.b16 %v2007
        %v2468 = vunpack.c.l.b16 %v2008
        %v2469 = vunpack.c.h.b16 %v2008
        %v2470 = vunpack.c.l.b16 %v2009
        %v2471 = vunpack.c.h.b16 %v2009
        %v2472 = vunpack.c.l.b16 %v2010
        %v2473 = vunpack.c.h.b16 %v2010
        %v2474 = vunpack.c.l.b16 %v2011
        %v2475 = vunpack.c.h.b16 %v2011
        %v2476 = vunpack.c.l.b16 %v2012
        %v2477 = vunpack.c.h.b16 %v2012
        %v2478 = vunpack.c.l.b16 %v2013
        %v2479 = vunpack.c.h.b16 %v2013
        %v2480 = vunpack.c.l.b16 %v2014
        %v2481 = vunpack.c.h.b16 %v2014
        %v2482 = vunpack.c.l.b16 %v2015
        %v2483 = vunpack.c.h.b16 %v2015
        %v2484 = vunpack.c.l.b16 %v2016
        %v2485 = vunpack.c.h.b16 %v2016
        %v2486 = vunpack.c.l.b16 %v2017
        %v2487 = vunpack.c.h.b16 %v2017
        %v2488 = vunpack.c.l.b16 %v2018
        %v2489 = vunpack.c.h.b16 %v2018
        %v2490 = vunpack.c.l.b16 %v2019
        %v2491 = vunpack.c.h.b16 %v2019
        %v2492 = vunpack.c.l.b16 %v2020
        %v2493 = vunpack.c.h.b16 %v2020
        %v2494 = vunpack.c.l.b16 %v2021
        %v2495 = vunpack.c.h.b16 %v2021
        %v2496 = vunpack.c.l.b16 %v2022
        %v2497 = vunpack.c.h.b16 %v2022
        %v2498 = vunpack.c.l.b16 %v2023
        %v2499 = vunpack.c.h.b16 %v2023
        %v2500 = vunpack.c.l.b16 %v2024
        %v2501 = vunpack.c.h.b16 %v2024
        %v2502 = vunpack.c.l.b16 %v2025
        %v2503 = vunpack.c.h.b16 %v2025
        %v2504 = vunpack.c.l.b16 %v2026
        %v2505 = vunpack.c.h.b16 %v2026
        %v2506 = vunpack.c.l.b16 %v2027
        %v2507 = vunpack.c.h.b16 %v2027
        %v2508 = vunpack.c.l.b16 %v2028
        %v2509 = vunpack.c.h.b16 %v2028
        %v2510 = vunpack.c.l.b16 %v2029
        %v2511 = vunpack.c.h.b16 %v2029
        %v2512 = vunpack.c.l.b16 %v2030
        %v2513 = vunpack.c.h.b16 %v2030
        %v2514 = vunpack.c.l.b16 %v2031
        %v2515 = vunpack.c.h.b16 %v2031
        %v2516 = vunpack.c.l.b16 %v2032
        %v2517 = vunpack.c.h.b16 %v2032
        %v2518 = vunpack.c.l.b16 %v2033
        %v2519 = vunpack.c.h.b16 %v2033
        %v2520 = vunpack.c.l.b16 %v2034
        %v2521 = vunpack.c.h.b16 %v2034
        %v2522 = vunpack.c.l.b16 %v2035
        %v2523 = vunpack.c.h.b16 %v2035
        %v2524 = vunpack.c.l.b16 %v2036
        %v2525 = vunpack.c.h.b16 %v2036
        %v2526 = vunpack.c.l.b16 %v2037
        %v2527 = vunpack.c.h.b16 %v2037
        %v2528 = vunpack.c.l.b16 %v2038
        %v2529 = vunpack.c.h.b16 %v2038
        %v2530 = vunpack.c.l.b16 %v2039
        %v2531 = vunpack.c.h.b16 %v2039
        %v2532 = vunpack.c.l.b16 %v2040
        %v2533 = vunpack.c.h.b16 %v2040
        %v2534 = vunpack.c.l.b16 %v2041
        %v2535 = vunpack.c.h.b16 %v2041
        %v2536 = vunpack.c.l.b16 %v2042
        %v2537 = vunpack.c.h.b16 %v2042
        %v2538 = vunpack.c.l.b16 %v2043
        %v2539 = vunpack.c.h.b16 %v2043
        %v2540 = vunpack.c.l.b16 %v2044
        %v2541 = vunpack.c.h.b16 %v2044
        %v2542 = vunpack.c.l.b16 %v2045
        %v2543 = vunpack.c.h.b16 %v2045
        %v2544 = vunpack.c.l.b16 %v2046
        %v2545 = vunpack.c.h.b16 %v2046
        %v2546 = vunpack.c.l.b16 %v2047
        %v2547 = vunpack.c.h.b16 %v2047
        %v2548 = vunpack.c.l.b16 %v2048
        %v2549 = vunpack.c.h.b16 %v2048
        %v2550 = vunpack.c.l.b16 %v2049
        %v2551 = vunpack.c.h.b16 %v2049
        %v2552 = vpack.c.b16 %v2236, %v2232
        %v2553 = vpack.c.b16 %v2237, %v2233
        %v2554 = vpack.c.b16 %v2238, %v2234
        %v2555 = vpack.c.b16 %v2239, %v2235
        %v2556 = vpack.c.b16 %v2244, %v2240
        %v2557 = vpack.c.b16 %v2245, %v2241
        %v2558 = vpack.c.b16 %v2246, %v2242
        %v2559 = vpack.c.b16 %v2247, %v2243
        %v2560 = vpack.c.b16 %v2252, %v2248
        %v2561 = vpack.c.b16 %v2253, %v2249
        %v2562 = vpack.c.b16 %v2254, %v2250
        %v2563 = vpack.c.b16 %v2255, %v2251
        %v2564 = vpack.c.b16 %v2260, %v2256
        %v2565 = vpack.c.b16 %v2261, %v2257
        %v2566 = vpack.c.b16 %v2262, %v2258
        %v2567 = vpack.c.b16 %v2263, %v2259
        %v2568 = vpack.c.b16 %v2268, %v2264
        %v2569 = vpack.c.b16 %v2269, %v2265
        %v2570 = vpack.c.b16 %v2270, %v2266
        %v2571 = vpack.c.b16 %v2271, %v2267
        %v2572 = vpack.c.b16 %v2276, %v2272
        %v2573 = vpack.c.b16 %v2277, %v2273
        %v2574 = vpack.c.b16 %v2278, %v2274
        %v2575 = vpack.c.b16 %v2279, %v2275
        %v2576 = vpack.c.b16 %v2284, %v2280
        %v2577 = vpack.c.b16 %v2285, %v2281
        %v2578 = vpack.c.b16 %v2286, %v2282
        %v2579 = vpack.c.b16 %v2287, %v2283
        %v2580 = vpack.c.b16 %v2292, %v2288
        %v2581 = vpack.c.b16 %v2293, %v2289
        %v2582 = vpack.c.b16 %v2294, %v2290
        %v2583 = vpack.c.b16 %v2295, %v2291
        %v2584 = vpack.c.b16 %v2300, %v2296
        %v2585 = vpack.c.b16 %v2301, %v2297
        %v2586 = vpack.c.b16 %v2302, %v2298
        %v2587 = vpack.c.b16 %v2303, %v2299
        %v2588 = vpack.c.b16 %v2308, %v2304
        %v2589 = vpack.c.b16 %v2309, %v2305
        %v2590 = vpack.c.b16 %v2310, %v2306
        %v2591 = vpack.c.b16 %v2311, %v2307
        %v2592 = vpack.c.b16 %v2316, %v2312
        %v2593 = vpack.c.b16 %v2317, %v2313
        %v2594 = vpack.c.b16 %v2318, %v2314
        %v2595 = vpack.c.b16 %v2319, %v2315
        %v2596 = vpack.c.b16 %v2324, %v2320
        %v2597 = vpack.c.b16 %v2325, %v2321
        %v2598 = vpack.c.b16 %v2326, %v2322
        %v2599 = vpack.c.b16 %v2327, %v2323
        %v2600 = vpack.c.b16 %v2332, %v2328
        %v2601 = vpack.c.b16 %v2333, %v2329
        %v2602 = vpack.c.b16 %v2334, %v2330
        %v2603 = vpack.c.b16 %v2335, %v2331
        %v2604 = vpack.c.b16 %v2340, %v2336
        %v2605 = vpack.c.b16 %v2341, %v2337
        %v2606 = vpack.c.b16 %v2342, %v2338
        %v2607 = vpack.c.b16 %v2343, %v2339
        %v2608 = vpack.c.b16 %v2348, %v2344
        %v2609 = vpack.c.b16 %v2349, %v2345
        %v2610 = vpack.c.b16 %v2350, %v2346
        %v2611 = vpack.c.b16 %v2351, %v2347
        %v2612 = vpack.c.b16 %v2356, %v2352
        %v2613 = vpack.c.b16 %v2357, %v2353
        %v2614 = vpack.c.b16 %v2358, %v2354
        %v2615 = vpack.c.b16 %v2359, %v2355
        %v2616 = vpack.c.b16 %v2364, %v2360
        %v2617 = vpack.c.b16 %v2365, %v2361
        %v2618 = vpack.c.b16 %v2366, %v2362
        %v2619 = vpack.c.b16 %v2367, %v2363
        %v2620 = vpack.c.b16 %v2372, %v2368
        %v2621 = vpack.c.b16 %v2373, %v2369
        %v2622 = vpack.c.b16 %v2374, %v2370
        %v2623 = vpack.c.b16 %v2375, %v2371
        %v2624 = vpack.c.b16 %v2380, %v2376
        %v2625 = vpack.c.b16 %v2381, %v2377
        %v2626 = vpack.c.b16 %v2382, %v2378
        %v2627 = vpack.c.b16 %v2383, %v2379
        %v2628 = vpack.c.b16 %v2388, %v2384
        %v2629 = vpack.c.b16 %v2389, %v2385
        %v2630 = vpack.c.b16 %v2390, %v2386
        %v2631 = vpack.c.b16 %v2391, %v2387
        %v2632 = vpack.c.b16 %v2396, %v2392
        %v2633 = vpack.c.b16 %v2397, %v2393
        %v2634 = vpack.c.b16 %v2398, %v2394
        %v2635 = vpack.c.b16 %v2399, %v2395
        %v2636 = vpack.c.b16 %v2404, %v2400
        %v2637 = vpack.c.b16 %v2405, %v2401
        %v2638 = vpack.c.b16 %v2406, %v2402
        %v2639 = vpack.c.b16 %v2407, %v2403
        %v2640 = vpack.c.b16 %v2412, %v2408
        %v2641 = vpack.c.b16 %v2413, %v2409
        %v2642 = vpack.c.b16 %v2414, %v2410
        %v2643 = vpack.c.b16 %v2415, %v2411
        %v2644 = vpack.c.b16 %v2420, %v2416
        %v2645 = vpack.c.b16 %v2421, %v2417
        %v2646 = vpack.c.b16 %v2422, %v2418
        %v2647 = vpack.c.b16 %v2423, %v2419
        %v2648 = vpack.c.b16 %v2428, %v2424
        %v2649 = vpack.c.b16 %v2429, %v2425
        %v2650 = vpack.c.b16 %v2430, %v2426
        %v2651 = vpack.c.b16 %v2431, %v2427
        %v2652 = vpack.c.b16 %v2436, %v2432
        %v2653 = vpack.c.b16 %v2437, %v2433
        %v2654 = vpack.c.b16 %v2438, %v2434
        %v2655 = vpack.c.b16 %v2439, %v2435
        %v2656 = vpack.c.b16 %v2444, %v2440
        %v2657 = vpack.c.b16 %v2445, %v2441
        %v2658 = vpack.c.b16 %v2446, %v2442
        %v2659 = vpack.c.b16 %v2447, %v2443
        %v2660 = vpack.c.b16 %v2452, %v2448
        %v2661 = vpack.c.b16 %v2453, %v2449
        %v2662 = vpack.c.b16 %v2454, %v2450
        %v2663 = vpack.c.b16 %v2455, %v2451
        %v2664 = vpack.c.b16 %v2460, %v2456
        %v2665 = vpack.c.b16 %v2461, %v2457
        %v2666 = vpack.c.b16 %v2462, %v2458
        %v2667 = vpack.c.b16 %v2463, %v2459
        %v2668 = vpack.c.b16 %v2468, %v2464
        %v2669 = vpack.c.b16 %v2469, %v2465
        %v2670 = vpack.c.b16 %v2470, %v2466
        %v2671 = vpack.c.b16 %v2471, %v2467
        %v2672 = vpack.c.b16 %v2476, %v2472
        %v2673 = vpack.c.b16 %v2477, %v2473
        %v2674 = vpack.c.b16 %v2478, %v2474
        %v2675 = vpack.c.b16 %v2479, %v2475
        %v2676 = vpack.c.b16 %v2484, %v2480
        %v2677 = vpack.c.b16 %v2485, %v2481
        %v2678 = vpack.c.b16 %v2486, %v2482
        %v2679 = vpack.c.b16 %v2487, %v2483
        %v2680 = vpack.c.b16 %v2492, %v2488
        %v2681 = vpack.c.b16 %v2493, %v2489
        %v2682 = vpack.c.b16 %v2494, %v2490
        %v2683 = vpack.c.b16 %v2495, %v2491
        %v2684 = vpack.c.b16 %v2500, %v2496
        %v2685 = vpack.c.b16 %v2501, %v2497
        %v2686 = vpack.c.b16 %v2502, %v2498
        %v2687 = vpack.c.b16 %v2503, %v2499
        %v2688 = vpack.c.b16 %v2508, %v2504
        %v2689 = vpack.c.b16 %v2509, %v2505
        %v2690 = vpack.c.b16 %v2510, %v2506
        %v2691 = vpack.c.b16 %v2511, %v2507
        %v2692 = vpack.c.b16 %v2516, %v2512
        %v2693 = vpack.c.b16 %v2517, %v2513
        %v2694 = vpack.c.b16 %v2518, %v2514
        %v2695 = vpack.c.b16 %v2519, %v2515
        %v2696 = vpack.c.b16 %v2524, %v2520
        %v2697 = vpack.c.b16 %v2525, %v2521
        %v2698 = vpack.c.b16 %v2526, %v2522
        %v2699 = vpack.c.b16 %v2527, %v2523
        %v2700 = vpack.c.b16 %v2532, %v2528
        %v2701 = vpack.c.b16 %v2533, %v2529
        %v2702 = vpack.c.b16 %v2534, %v2530
        %v2703 = vpack.c.b16 %v2535, %v2531
        %v2704 = vpack.c.b16 %v2540, %v2536
        %v2705 = vpack.c.b16 %v2541, %v2537
        %v2706 = vpack.c.b16 %v2542, %v2538
        %v2707 = vpack.c.b16 %v2543, %v2539
        %v2708 = vpack.c.b16 %v2548, %v2544
        %v2709 = vpack.c.b16 %v2549, %v2545
        %v2710 = vpack.c.b16 %v2550, %v2546
        %v2711 = vpack.c.b16 %v2551, %v2547
        %2872 = vmatprep.subr.bf16.mxu0 %v2553
        %2873 = vmatpush1.bf16.msra.mxu0 %v2552
        %2874 = vmatprep.subr.bf16.mxu0 %v2557
        %2875 = vmatpush1.bf16.msra.mxu0 %v2556
        %2876 = vmatprep.subr.bf16.mxu0 %v2561
        %2877 = vmatpush1.bf16.msra.mxu0 %v2560
        %2878 = vmatprep.subr.bf16.mxu0 %v2565
        %2879 = vmatpush1.bf16.msra.mxu0 %v2564
        %2880 = vmatprep.subr.bf16.mxu0 %v2569
        %2881 = vmatpush1.bf16.msra.mxu0 %v2568
        %2882 = vmatprep.subr.bf16.mxu0 %v2573
        %2883 = vmatpush1.bf16.msra.mxu0 %v2572
        %2884 = vmatprep.subr.bf16.mxu0 %v2577
        %2885 = vmatpush1.bf16.msra.mxu0 %v2576
        %2886 = vmatprep.subr.bf16.mxu0 %v2581
        %2887 = vmatpush1.bf16.msra.mxu0 %v2580
        %2888 = vmatprep.subr.bf16.mxu0 %v2585
        %2889 = vmatpush1.bf16.msra.mxu0 %v2584
        %2890 = vmatprep.subr.bf16.mxu0 %v2589
        %2891 = vmatpush1.bf16.msra.mxu0 %v2588
        %2892 = vmatprep.subr.bf16.mxu0 %v2593
        %2893 = vmatpush1.bf16.msra.mxu0 %v2592
        %2894 = vmatprep.subr.bf16.mxu0 %v2597
        %2895 = vmatpush1.bf16.msra.mxu0 %v2596
        %2896 = vmatprep.subr.bf16.mxu0 %v2601
        %2897 = vmatpush1.bf16.msra.mxu0 %v2600
        %2898 = vmatprep.subr.bf16.mxu0 %v2605
        %2899 = vmatpush1.bf16.msra.mxu0 %v2604
        %2900 = vmatprep.subr.bf16.mxu0 %v2609
        %2901 = vmatpush1.bf16.msra.mxu0 %v2608
        %2902 = vmatprep.subr.bf16.mxu0 %v2613
        %2903 = vmatpush1.bf16.msra.mxu0 %v2612
        %2904 = vmatprep.mubr.bf16.mxu0 %v1881
        %2905 = vmatmul.mubr.bf16.gmra.mrb[0].mxu0 %v1880
        %v2906 = vpop.f32.mrb[0].mxu0
        %v2907 = vadd.f32 %v2055, %v2906
        %v2908 = vpop.f32.mrb[0].mxu0
        %v2909 = vadd.f32 %v2059, %v2908
        %v2910 = vpop.f32.mrb[0].mxu0
        %v2911 = vadd.f32 %v2055, %v2910
        %v2912 = vpop.f32.mrb[0].mxu0
        %v2913 = vadd.f32 %v2059, %v2912
        %2914 = vmatprep.mubr.bf16.mxu0 %v1886
        %2915 = vmatmul.mubr.bf16.gmra.mrb[0].mxu0 %v1885
        %v2916 = vpop.f32.mrb[0].mxu0
        %v2917 = vadd.f32 %v2055, %v2916
        %v2918 = vpop.f32.mrb[0].mxu0
        %v2919 = vadd.f32 %v2059, %v2918
        %v2920 = vpop.f32.mrb[0].mxu0
        %v2921 = vadd.f32 %v2055, %v2920
        %v2922 = vpop.f32.mrb[0].mxu0
        %v2923 = vadd.f32 %v2059, %v2922
        %2924 = vdwg.mxu0
        %2925 = vmatprep.subr.bf16.mxu0 %v2617
        %2926 = vmatpush1.bf16.msra.mxu0 %v2616
        %2927 = vmatprep.subr.bf16.mxu0 %v2621
        %2928 = vmatpush1.bf16.msra.mxu0 %v2620
        %2929 = vmatprep.subr.bf16.mxu0 %v2625
        %2930 = vmatpush1.bf16.msra.mxu0 %v2624
        %2931 = vmatprep.subr.bf16.mxu0 %v2629
        %2932 = vmatpush1.bf16.msra.mxu0 %v2628
        %2933 = vmatprep.subr.bf16.mxu0 %v2633
        %2934 = vmatpush1.bf16.msra.mxu0 %v2632
        %2935 = vmatprep.subr.bf16.mxu0 %v2637
        %2936 = vmatpush1.bf16.msra.mxu0 %v2636
        %2937 = vmatprep.subr.bf16.mxu0 %v2641
        %2938 = vmatpush1.bf16.msra.mxu0 %v2640
        %2939 = vmatprep.subr.bf16.mxu0 %v2645
        %2940 = vmatpush1.bf16.msra.mxu0 %v2644
        %2941 = vmatprep.subr.bf16.mxu0 %v2649
        %2942 = vmatpush1.bf16.msra.mxu0 %v2648
        %2943 = vmatprep.subr.bf16.mxu0 %v2653
        %2944 = vmatpush1.bf16.msra.mxu0 %v2652
        %2945 = vmatprep.subr.bf16.mxu0 %v2657
        %2946 = vmatpush1.bf16.msra.mxu0 %v2656
        %2947 = vmatprep.subr.bf16.mxu0 %v2661
        %2948 = vmatpush1.bf16.msra.mxu0 %v2660
        %2949 = vmatprep.subr.bf16.mxu0 %v2665
        %2950 = vmatpush1.bf16.msra.mxu0 %v2664
        %2951 = vmatprep.subr.bf16.mxu0 %v2669
        %2952 = vmatpush1.bf16.msra.mxu0 %v2668
        %2953 = vmatprep.subr.bf16.mxu0 %v2673
        %2954 = vmatpush1.bf16.msra.mxu0 %v2672
        %2955 = vmatprep.subr.bf16.mxu0 %v2677
        %2956 = vmatpush1.bf16.msra.mxu0 %v2676
        %2957 = vmatprep.mubr.bf16.mxu0 %v1883
        %2958 = vmatmul.mubr.bf16.gmra.mrb[0].mxu0 %v1882
        %v2959 = vpop.f32.mrb[0].mxu0
        %v2960 = vadd.f32 %v2907, %v2959
        %v2961 = vpop.f32.mrb[0].mxu0
        %v2962 = vadd.f32 %v2909, %v2961
        %v2963 = vpop.f32.mrb[0].mxu0
        %v2964 = vadd.f32 %v2911, %v2963
        %v2965 = vpop.f32.mrb[0].mxu0
        %v2966 = vadd.f32 %v2913, %v2965
        %2967 = vmatprep.mubr.bf16.mxu0 %v1888
        %2968 = vmatmul.mubr.bf16.gmra.mrb[0].mxu0 %v1887
        %v2969 = vpop.f32.mrb[0].mxu0
        %v2970 = vadd.f32 %v2917, %v2969
        %v2971 = vpop.f32.mrb[0].mxu0
        %v2972 = vadd.f32 %v2919, %v2971
        %v2973 = vpop.f32.mrb[0].mxu0
        %v2974 = vadd.f32 %v2921, %v2973
        %v2975 = vpop.f32.mrb[0].mxu0
        %v2976 = vadd.f32 %v2923, %v2975
        %2977 = vdwg.mxu0
        %2978 = vmatprep.subr.bf16.mxu0 %v2681
        %2979 = vmatpush1.bf16.msra.mxu0 %v2680
        %2980 = vmatprep.subr.bf16.mxu0 %v2685
        %2981 = vmatpush1.bf16.msra.mxu0 %v2684
        %2982 = vmatprep.subr.bf16.mxu0 %v2689
        %2983 = vmatpush1.bf16.msra.mxu0 %v2688
        %2984 = vmatprep.subr.bf16.mxu0 %v2693
        %2985 = vmatpush1.bf16.msra.mxu0 %v2692
        %2986 = vmatprep.subr.bf16.mxu0 %v2697
        %2987 = vmatpush1.bf16.msra.mxu0 %v2696
        %2988 = vmatprep.subr.bf16.mxu0 %v2701
        %2989 = vmatpush1.bf16.msra.mxu0 %v2700
        %2990 = vmatprep.subr.bf16.mxu0 %v2705
        %2991 = vmatpush1.bf16.msra.mxu0 %v2704
        %2992 = vmatprep.subr.bf16.mxu0 %v2709
        %2993 = vmatpush1.bf16.msra.mxu0 %v2708
        %2994 = vmatprep.subr.bf16.mxu0 0
        %2995 = vmatpush1.bf16.msra.mxu0 0
        %2996 = vmatprep.subr.bf16.mxu0 0
        %2997 = vmatpush1.bf16.msra.mxu0 0
        %2998 = vmatprep.subr.bf16.mxu0 0
        %2999 = vmatpush1.bf16.msra.mxu0 0
        %3000 = vmatprep.subr.bf16.mxu0 0
        %3001 = vmatpush1.bf16.msra.mxu0 0
        %3002 = vmatprep.subr.bf16.mxu0 0
        %3003 = vmatpush1.bf16.msra.mxu0 0
        %3004 = vmatprep.subr.bf16.mxu0 0
        %3005 = vmatpush1.bf16.msra.mxu0 0
        %3006 = vmatprep.subr.bf16.mxu0 0
        %3007 = vmatpush1.bf16.msra.mxu0 0
        %3008 = vmatprep.subr.bf16.mxu0 0
        %3009 = vmatpush1.bf16.msra.mxu0 0
        %3010 = vmatprep.mubr.bf16.mxu0 0
        %3011 = vmatmul.mubr.bf16.gmra.mrb[0].mxu0 %v1884
        %v3012 = vpop.f32.mrb[0].mxu0
        %v3013 = vadd.f32 %v2960, %v3012
        %v3014 = vpop.f32.mrb[0].mxu0
        %v3015 = vadd.f32 %v2962, %v3014
        %v3016 = vpop.f32.mrb[0].mxu0
        %v3017 = vadd.f32 %v2964, %v3016
        %v3018 = vpop.f32.mrb[0].mxu0
        %v3019 = vadd.f32 %v2966, %v3018
        %3020 = vmatprep.mubr.bf16.mxu0 0
        %3021 = vmatmul.mubr.bf16.gmra.mrb[0].mxu0 %v1889
        %v3022 = vpop.f32.mrb[0].mxu0
        %v3023 = vadd.f32 %v2970, %v3022
        %v3024 = vpop.f32.mrb[0].mxu0
        %v3025 = vadd.f32 %v2972, %v3024
        %v3026 = vpop.f32.mrb[0].mxu0
        %v3027 = vadd.f32 %v2974, %v3026
        %v3028 = vpop.f32.mrb[0].mxu0
        %v3029 = vadd.f32 %v2976, %v3028
        %3030 = vdwg.mxu0
        %3031 = vmatprep.subr.bf16.mxu0 %v2555
        %3032 = vmatpush1.bf16.msra.mxu0 %v2554
        %3033 = vmatprep.subr.bf16.mxu0 %v2559
        %3034 = vmatpush1.bf16.msra.mxu0 %v2558
        %3035 = vmatprep.subr.bf16.mxu0 %v2563
        %3036 = vmatpush1.bf16.msra.mxu0 %v2562
        %3037 = vmatprep.subr.bf16.mxu0 %v2567
        %3038 = vmatpush1.bf16.msra.mxu0 %v2566
        %3039 = vmatprep.subr.bf16.mxu0 %v2571
        %3040 = vmatpush1.bf16.msra.mxu0 %v2570
        %3041 = vmatprep.subr.bf16.mxu0 %v2575
        %3042 = vmatpush1.bf16.msra.mxu0 %v2574
        %3043 = vmatprep.subr.bf16.mxu0 %v2579
        %3044 = vmatpush1.bf16.msra.mxu0 %v2578
        %3045 = vmatprep.subr.bf16.mxu0 %v2583
        %3046 = vmatpush1.bf16.msra.mxu0 %v2582
        %3047 = vmatprep.subr.bf16.mxu0 %v2587
        %3048 = vmatpush1.bf16.msra.mxu0 %v2586
        %3049 = vmatprep.subr.bf16.mxu0 %v2591
        %3050 = vmatpush1.bf16.msra.mxu0 %v2590
        %3051 = vmatprep.subr.bf16.mxu0 %v2595
        %3052 = vmatpush1.bf16.msra.mxu0 %v2594
        %3053 = vmatprep.subr.bf16.mxu0 %v2599
        %3054 = vmatpush1.bf16.msra.mxu0 %v2598
        %3055 = vmatprep.subr.bf16.mxu0 %v2603
        %3056 = vmatpush1.bf16.msra.mxu0 %v2602
        %3057 = vmatprep.subr.bf16.mxu0 %v2607
        %3058 = vmatpush1.bf16.msra.mxu0 %v2606
        %3059 = vmatprep.subr.bf16.mxu0 %v2611
        %3060 = vmatpush1.bf16.msra.mxu0 %v2610
        %3061 = vmatprep.subr.bf16.mxu0 %v2615
        %3062 = vmatpush1.bf16.msra.mxu0 %v2614
        %3063 = vmatprep.mubr.bf16.mxu0 %v1881
        %3064 = vmatmul.mubr.bf16.gmra.mrb[0].mxu0 %v1880
        %v3065 = vpop.f32.mrb[0].mxu0
        %v3066 = vadd.f32 %v2063, %v3065
        %v3067 = vpop.f32.mrb[0].mxu0
        %v3068 = vadd.f32 %v2067, %v3067
        %v3069 = vpop.f32.mrb[0].mxu0
        %v3070 = vadd.f32 %v2063, %v3069
        %v3071 = vpop.f32.mrb[0].mxu0
        %v3072 = vadd.f32 %v2067, %v3071
        %3073 = vmatprep.mubr.bf16.mxu0 %v1886
        %3074 = vmatmul.mubr.bf16.gmra.mrb[0].mxu0 %v1885
        %v3075 = vpop.f32.mrb[0].mxu0
        %v3076 = vadd.f32 %v2063, %v3075
        %v3077 = vpop.f32.mrb[0].mxu0
        %v3078 = vadd.f32 %v2067, %v3077
        %v3079 = vpop.f32.mrb[0].mxu0
        %v3080 = vadd.f32 %v2063, %v3079
        %v3081 = vpop.f32.mrb[0].mxu0
        %v3082 = vadd.f32 %v2067, %v3081
        %3083 = vdwg.mxu0
        %3084 = vmatprep.subr.bf16.mxu0 %v2619
        %3085 = vmatpush1.bf16.msra.mxu0 %v2618
        %3086 = vmatprep.subr.bf16.mxu0 %v2623
        %3087 = vmatpush1.bf16.msra.mxu0 %v2622
        %3088 = vmatprep.subr.bf16.mxu0 %v2627
        %3089 = vmatpush1.bf16.msra.mxu0 %v2626
        %3090 = vmatprep.subr.bf16.mxu0 %v2631
        %3091 = vmatpush1.bf16.msra.mxu0 %v2630
        %3092 = vmatprep.subr.bf16.mxu0 %v2635
        %3093 = vmatpush1.bf16.msra.mxu0 %v2634
        %3094 = vmatprep.subr.bf16.mxu0 %v2639
        %3095 = vmatpush1.bf16.msra.mxu0 %v2638
        %3096 = vmatprep.subr.bf16.mxu0 %v2643
        %3097 = vmatpush1.bf16.msra.mxu0 %v2642
        %3098 = vmatprep.subr.bf16.mxu0 %v2647
        %3099 = vmatpush1.bf16.msra.mxu0 %v2646
        %3100 = vmatprep.subr.bf16.mxu0 %v2651
        %3101 = vmatpush1.bf16.msra.mxu0 %v2650
        %3102 = vmatprep.subr.bf16.mxu0 %v2655
        %3103 = vmatpush1.bf16.msra.mxu0 %v2654
        %3104 = vmatprep.subr.bf16.mxu0 %v2659
        %3105 = vmatpush1.bf16.msra.mxu0 %v2658
        %3106 = vmatprep.subr.bf16.mxu0 %v2663
        %3107 = vmatpush1.bf16.msra.mxu0 %v2662
        %3108 = vmatprep.subr.bf16.mxu0 %v2667
        %3109 = vmatpush1.bf16.msra.mxu0 %v2666
        %3110 = vmatprep.subr.bf16.mxu0 %v2671
        %3111 = vmatpush1.bf16.msra.mxu0 %v2670
        %3112 = vmatprep.subr.bf16.mxu0 %v2675
        %3113 = vmatpush1.bf16.msra.mxu0 %v2674
        %3114 = vmatprep.subr.bf16.mxu0 %v2679
        %3115 = vmatpush1.bf16.msra.mxu0 %v2678
        %3116 = vmatprep.mubr.bf16.mxu0 %v1883
        %3117 = vmatmul.mubr.bf16.gmra.mrb[0].mxu0 %v1882
        %v3118 = vpop.f32.mrb[0].mxu0
        %v3119 = vadd.f32 %v3066, %v3118
        %v3120 = vpop.f32.mrb[0].mxu0
        %v3121 = vadd.f32 %v3068, %v3120
        %v3122 = vpop.f32.mrb[0].mxu0
        %v3123 = vadd.f32 %v3070, %v3122
        %v3124 = vpop.f32.mrb[0].mxu0
        %v3125 = vadd.f32 %v3072, %v3124
        %3126 = vmatprep.mubr.bf16.mxu0 %v1888
        %3127 = vmatmul.mubr.bf16.gmra.mrb[0].mxu0 %v1887
        %v3128 = vpop.f32.mrb[0].mxu0
        %v3129 = vadd.f32 %v3076, %v3128
        %v3130 = vpop.f32.mrb[0].mxu0
        %v3131 = vadd.f32 %v3078, %v3130
        %v3132 = vpop.f32.mrb[0].mxu0
        %v3133 = vadd.f32 %v3080, %v3132
        %v3134 = vpop.f32.mrb[0].mxu0
        %v3135 = vadd.f32 %v3082, %v3134
        %3136 = vdwg.mxu0
        %3137 = vmatprep.subr.bf16.mxu0 %v2683
        %3138 = vmatpush1.bf16.msra.mxu0 %v2682
        %3139 = vmatprep.subr.bf16.mxu0 %v2687
        %3140 = vmatpush1.bf16.msra.mxu0 %v2686
        %3141 = vmatprep.subr.bf16.mxu0 %v2691
        %3142 = vmatpush1.bf16.msra.mxu0 %v2690
        %3143 = vmatprep.subr.bf16.mxu0 %v2695
        %3144 = vmatpush1.bf16.msra.mxu0 %v2694
        %3145 = vmatprep.subr.bf16.mxu0 %v2699
        %3146 = vmatpush1.bf16.msra.mxu0 %v2698
        %3147 = vmatprep.subr.bf16.mxu0 %v2703
        %3148 = vmatpush1.bf16.msra.mxu0 %v2702
        %3149 = vmatprep.subr.bf16.mxu0 %v2707
        %3150 = vmatpush1.bf16.msra.mxu0 %v2706
        %3151 = vmatprep.subr.bf16.mxu0 %v2711
        %3152 = vmatpush1.bf16.msra.mxu0 %v2710
        %3153 = vmatprep.subr.bf16.mxu0 0
        %3154 = vmatpush1.bf16.msra.mxu0 0
        %3155 = vmatprep.subr.bf16.mxu0 0
        %3156 = vmatpush1.bf16.msra.mxu0 0
        %3157 = vmatprep.subr.bf16.mxu0 0
        %3158 = vmatpush1.bf16.msra.mxu0 0
        %3159 = vmatprep.subr.bf16.mxu0 0
        %3160 = vmatpush1.bf16.msra.mxu0 0
        %3161 = vmatprep.subr.bf16.mxu0 0
        %3162 = vmatpush1.bf16.msra.mxu0 0
        %3163 = vmatprep.subr.bf16.mxu0 0
        %3164 = vmatpush1.bf16.msra.mxu0 0
        %3165 = vmatprep.subr.bf16.mxu0 0
        %3166 = vmatpush1.bf16.msra.mxu0 0
        %3167 = vmatprep.subr.bf16.mxu0 0
        %3168 = vmatpush1.bf16.msra.mxu0 0
        %3169 = vmatprep.mubr.bf16.mxu0 0
        %3170 = vmatmul.mubr.bf16.gmra.mrb[0].mxu0 %v1884
        %v3171 = vpop.f32.mrb[0].mxu0
        %v3172 = vadd.f32 %v3119, %v3171
        %v3173 = vpop.f32.mrb[0].mxu0
        %v3174 = vadd.f32 %v3121, %v3173
        %v3175 = vpop.f32.mrb[0].mxu0
        %v3176 = vadd.f32 %v3123, %v3175
        %v3177 = vpop.f32.mrb[0].mxu0
        %v3178 = vadd.f32 %v3125, %v3177
        %3179 = vmatprep.mubr.bf16.mxu0 0
        %3180 = vmatmul.mubr.bf16.gmra.mrb[0].mxu0 %v1889
        %v3181 = vpop.f32.mrb[0].mxu0
        %v3182 = vadd.f32 %v3129, %v3181
        %v3183 = vpop.f32.mrb[0].mxu0
        %v3184 = vadd.f32 %v3131, %v3183
        %v3185 = vpop.f32.mrb[0].mxu0
        %v3186 = vadd.f32 %v3133, %v3185
        %v3187 = vpop.f32.mrb[0].mxu0
        %v3188 = vadd.f32 %v3135, %v3187
        %3189 = vdwg.mxu0
        %3190 = vst [vmem:[%s354] sm:$0xff] %v3013
        %3191 = vst [vmem:[%s354 + $0x8] sm:$0xff] %v3015
        %3192 = vst [vmem:[%s354 + $0x10] sm:$0xff] %v3172
        %3193 = vst [vmem:[%s354 + $0x18] sm:$0xff] %v3174
        %3194 = vst [vmem:[%s354 + $0x20] sm:$0xff] %v3017
        %3195 = vst [vmem:[%s354 + $0x28] sm:$0xff] %v3019
        %3196 = vst [vmem:[%s354 + $0x30] sm:$0xff] %v3176
        %3197 = vst [vmem:[%s354 + $0x38] sm:$0xff] %v3178
        %3198 = vst [vmem:[%s354 + $0x40] sm:$0xff] %v3023
        %3199 = vst [vmem:[%s354 + $0x48] sm:$0xff] %v3025
        %3200 = vst [vmem:[%s354 + $0x50] sm:$0xff] %v3182
        %3201 = vst [vmem:[%s354 + $0x58] sm:$0xff] %v3184
        %3202 = vst [vmem:[%s354 + $0x60] sm:$0xff] %v3027
        %3203 = vst [vmem:[%s354 + $0x68] sm:$0xff] %v3029
        %3204 = vst [vmem:[%s354 + $0x70] sm:$0xff] %v3186
        %3205 = vst [vmem:[%s354 + $0x78] sm:$0xff] %v3188
        %s3206 = sand.u32 %s171, 1
        %s3207 = scalar_lea.sflag [#allocation5], %s3206
        %s3208 = sand.u32 %s171, 1
        %s3209 = smul.addr %s3208, 128
        %s3210 = scalar_lea.vmem [#allocation11], %s3209
        // Predicated region
        $region61: #{multi_phoc_forward.1} parent=43 // pred_check
          %p3211 = pneg %p181
        $region62: #{multi_phoc_forward.1} parent=43 // pred_check_branch
          %3213 = sbr.rel (%p3211) target = $region64
        $region63: #{multi_phoc_forward.1} parent=43 // pred_region
          %s3214 = smul.u32 4, %s27
          %s3215 = ssub.s32 5, %s3214
          %p3216 = scmp.lt.s32.totalorder %s3215, 4
          %s3217 = scalar_select %p3216, %s3215, 4
          %s3218 = smul.u32 128, %s3217
          %s3219 = smul.u32 %s3218, 4
          %s3221 = ssub.s32 2048, %s3219
          %3222 = vsyncadd %s3207, %s3221
          %p3223 = scmp.ne.s32.totalorder 0, %s3219
          %s3224 = smul.addr %s3214, 4
          %s3225 = smul.addr %s3224, 128
          %s3226 = scalar_lea.hbm %s6, %s3225
          %s3227 = smul.u32 32, %s3217
          %s3228 = sshll.u32 %s3210, 4
          %s3229 = int_to_ptr.vmem [resolvable:$true] %s3228
          %s3230 = sshll.u32 %s3227, 4
          %3234 = dma.vmem_to_hbm [thread:$0]  (%p3223), %s3229, %s3230, %s3226, %s3207, 512, 512, 32
        $region64: #{multi_phoc_forward.1} parent=43 // pred_fallthru
          _
      $region44: #{multi_phoc_forward.1} parent=5 // pred_fallthru
        _
      %p3235 = scmp.le.s32.totalorder 2, %s22
      // Predicated region
      $region65: #{multi_phoc_forward.1} parent=5 // pred_check
        %p3236 = pneg %p3235
      $region66: #{multi_phoc_forward.1} parent=5 // pred_check_branch
        %3238 = sbr.rel (%p3236) target = $region68
      $region67: #{multi_phoc_forward.1} parent=5 // pred_region
        %s3239 = ssub.s32 %s22, 2
        // Predicated region
        $region69: #{multi_phoc_forward.1} parent=67 // pred_check
          %p3240 = pneg %p187
        $region70: #{multi_phoc_forward.1} parent=67 // pred_check_branch
          %3242 = sbr.rel (%p3240) target = $region72
        $region71: #{multi_phoc_forward.1} parent=67 // pred_region
          %s3243 = sand.u32 %s172, 1
          %s3244 = scalar_lea.sflag [#allocation5], %s3243
          %s3245 = sand.u32 %s172, 1
          %s3246 = smul.addr %s3245, 128
          %s3247 = scalar_lea.vmem [#allocation11], %s3246
          %3248 = dma.done %s3244, 2048
        $region72: #{multi_phoc_forward.1} parent=67 // pred_fallthru
          _
      $region68: #{multi_phoc_forward.1} parent=5 // pred_fallthru
        _
    $region6: #{multi_phoc_forward.1} parent=1 // loop_footer
      %s26 = sadd.s32 1, %s22
    $region7: #{multi_phoc_forward.1} parent=1 // loop_footer_branch
      %21 = sbr.rel target = $region3
    $region8: #{multi_phoc_forward.1} parent=1 // loop_exit
      _
    %3249 = vsyncpa [#allocation4], 1
    %s3250 = scalar_lea.sflag [#allocation4], 1
    %3251 = vsyncpa %s3250, 1
    %3252 = vsyncpa [#allocation7], 1
    %s3253 = scalar_lea.sflag [#allocation7], 1
    %3254 = vsyncpa %s3253, 1
    %3255 = vsyncpa [#allocation10], 1
    %3256 = vsyncpa [#allocation5], 1
    %s3257 = scalar_lea.sflag [#allocation5], 1
    %3258 = vsyncpa %s3257, 1

</llo_original>
